<compile_context>
chip_gen: v7x
topology: tpu7x:2x2x1
jax: 0.10.0
libtpu: 0.0.40
codegen_flags: <defaults>
</compile_context>

<pallas_src>
import functools

import jax
import jax.numpy as jnp
from jax.experimental import pallas as pl
from jax.experimental.pallas import tpu as pltpu

# Layer widths of the PyTorch Net: input -> 50 -> 70 -> 100 -> 200 -> 350 -> 600 -> output
HIDDEN = (50, 70, 100, 200, 350, 600)
LANE = 128      # lane width (last-dim alignment)
SUBLANE = 8     # f32 sublane alignment


def _round_up(x, m):
    return (x + m - 1) // m * m


def mlp_kernel(x_ref, b_ref, *wo_refs):
    """One batch tile of the whole 7-layer MLP.

    x_ref : (TB, in_pad)      activation tile (compute dtype)
    b_ref : (8, max_width)    packed, zero-padded biases, f32 (row i = layer i bias)
    wo_refs[:-1] : padded weights (in_pad_i, out_pad_i), compute dtype, VMEM-resident
    wo_refs[-1]  : (TB, out_pad) f32 output tile
    """
    w_refs = wo_refs[:-1]
    o_ref = wo_refs[-1]
    n_layers = len(w_refs)

    h = x_ref[...]
    for i, w_ref in enumerate(w_refs):
        width = w_ref.shape[1]                       # static
        # MXU matmul with f32 accumulation; bias-add / ReLU stay in f32 (v5e-safe).
        y = jnp.dot(h, w_ref[...], preferred_element_type=jnp.float32)
        y = y + b_ref[i:i + 1, 0:width]
        if i < n_layers - 1:
            h = jnp.maximum(y, 0.0).astype(h.dtype)  # back to compute dtype for next MXU pass
        else:
            o_ref[...] = y.astype(o_ref.dtype)       # final layer: no ReLU


@functools.partial(jax.jit, static_argnames=("compute_dtype", "batch_tile"))
def net_forward(x, params, *, compute_dtype=jnp.float32, batch_tile=512):
    """params = list of (W, b) with W:(in,out), b:(1,out). Returns (B, out_size) f32."""
    orig_batch, in_size = x.shape
    out_size = params[-1][0].shape[1]

    # ---- padded (lane-dense) feature widths -------------------------------------
    widths = [_round_up(in_size, LANE)] + [_round_up(h, LANE) for h in HIDDEN] \
             + [_round_up(out_size, LANE)]
    in_pad, out_pad = widths[0], widths[-1]
    max_w = max(widths)

    # ---- zero-pad weights, pack biases into one (8, max_w) f32 buffer ------------
    w_pads = []
    b_packed = jnp.zeros((SUBLANE, max_w), jnp.float32)
    for li, (w, b) in enumerate(params):
        fi, fo = w.shape
        fi_p, fo_p = widths[li], widths[li + 1]
        w_p = jnp.zeros((fi_p, fo_p), jnp.float32).at[:fi, :fo].set(w.astype(jnp.float32))
        w_pads.append(w_p.astype(compute_dtype))
        b_packed = b_packed.at[li, :fo].set(b.reshape(-1).astype(jnp.float32))

    # ---- batch padding / tiling ---------------------------------------------------
    b_pad = _round_up(orig_batch, SUBLANE)
    tb = min(batch_tile, b_pad)
    b_pad = _round_up(b_pad, tb)
    x_p = jnp.zeros((b_pad, in_pad), compute_dtype).at[:orig_batch, :in_size].set(
        x.astype(compute_dtype))
    grid = (b_pad // tb,)

    # ---- block specs: activations tiled over batch, weights/biases resident -------
    x_spec = pl.BlockSpec((tb, in_pad), lambda i: (i, 0))
    b_spec = pl.BlockSpec(b_packed.shape, lambda i: (0, 0))
    w_specs = [pl.BlockSpec(w.shape, lambda i: (0, 0)) for w in w_pads]
    out_spec = pl.BlockSpec((tb, out_pad), lambda i: (i, 0))

    flops = 2 * b_pad * sum(widths[i] * widths[i + 1] for i in range(len(widths) - 1))
    bytes_accessed = (x_p.size * x_p.dtype.itemsize
                      + sum(w.size * w.dtype.itemsize for w in w_pads)
                      + b_packed.size * b_packed.dtype.itemsize
                      + b_pad * out_pad * 4)
    cost = pl.CostEstimate(flops=flops, transcendentals=0, bytes_accessed=bytes_accessed)

    out_p = pl.pallas_call(
        mlp_kernel,
        out_shape=jax.ShapeDtypeStruct((b_pad, out_pad), jnp.float32),
        grid=grid,
        in_specs=[x_spec, b_spec] + w_specs,
        out_specs=out_spec,
        compiler_params=pltpu.CompilerParams(dimension_semantics=("parallel",)),
        cost_estimate=cost,
    )(x_p, b_packed, *w_pads)

    # Padded rows/cols are numerically inert (zero inputs / zero weight cols / zero bias)
    # and are simply sliced off.
    return out_p[:orig_batch, :out_size]


def init_params(key, input_size, output_size):
    """Deterministic init mimicking torch.nn.Linear (uniform +-1/sqrt(fan_in))."""
    sizes = (input_size,) + HIDDEN + (output_size,)
    params = []
    for i in range(len(sizes) - 1):
        fan_in, fan_out = sizes[i], sizes[i + 1]
        key, kw, kb = jax.random.split(key, 3)
        bound = 1.0 / jnp.sqrt(jnp.float32(fan_in))
        w = jax.random.uniform(kw, (fan_in, fan_out), jnp.float32, -bound, bound)
        b = jax.random.uniform(kb, (1, fan_out), jnp.float32, -bound, bound)
        params.append((w, b))
    return params


def reference_forward(x, params):
    h = x
    for i, (w, b) in enumerate(params):
        h = h @ w + b
        if i < len(params) - 1:
            h = jnp.maximum(h, 0.0)
    return h


if __name__ == "__main__":
    input_size = 8
    output_size = 4
    batch = 2

    key = jax.random.PRNGKey(0)
    key, kx = jax.random.split(key)
    x = jax.random.normal(kx, (batch, input_size), jnp.float32)
    params = init_params(key, input_size, output_size)

    out = net_forward(x, params)                      # f32 path (exact vs reference)
    out = jax.block_until_ready(out)

    ref = reference_forward(x, params)
    assert out.shape == (batch, output_size)
    assert jnp.allclose(out, ref, atol=1e-4, rtol=1e-4), "mismatch vs reference"

    # On v6e/v7x, call net_forward(x, params, compute_dtype=jnp.bfloat16) for the
    # fast bf16 MXU path (accumulation stays f32 inside the kernel).
    print("KERNEL_OK")
</pallas_src>

<mosaic_0001>
module attributes {stable_mosaic.version = 11 : i64} {
  func.func @mlp_kernel(%arg0: i32, %arg1: memref<8x128xf32, #tpu.memory_space<vmem>>, %arg2: memref<8x640xf32, #tpu.memory_space<vmem>>, %arg3: memref<128x128xf32, #tpu.memory_space<vmem>>, %arg4: memref<128x128xf32, #tpu.memory_space<vmem>>, %arg5: memref<128x128xf32, #tpu.memory_space<vmem>>, %arg6: memref<128x256xf32, #tpu.memory_space<vmem>>, %arg7: memref<256x384xf32, #tpu.memory_space<vmem>>, %arg8: memref<384x640xf32, #tpu.memory_space<vmem>>, %arg9: memref<640x128xf32, #tpu.memory_space<vmem>>, %arg10: memref<8x128xf32, #tpu.memory_space<vmem>>) attributes {dimension_semantics = [#tpu.dimension_semantics<parallel>], iteration_bounds = array<i64: 1>, scalar_prefetch = 0 : i64, scratch_operands = 0 : i64, tpu.core_type = #tpu.core_type<tc>, window_params = [{transform_indices = @transform_0, window_bounds = array<i64: 8, 128>}, {pipeline_mode = #tpu.pipeline_mode<synchronous>, transform_indices = @transform_1, window_bounds = array<i64: 8, 640>}, {pipeline_mode = #tpu.pipeline_mode<synchronous>, transform_indices = @transform_2, window_bounds = array<i64: 128, 128>}, {pipeline_mode = #tpu.pipeline_mode<synchronous>, transform_indices = @transform_3, window_bounds = array<i64: 128, 128>}, {pipeline_mode = #tpu.pipeline_mode<synchronous>, transform_indices = @transform_4, window_bounds = array<i64: 128, 128>}, {pipeline_mode = #tpu.pipeline_mode<synchronous>, transform_indices = @transform_5, window_bounds = array<i64: 128, 256>}, {pipeline_mode = #tpu.pipeline_mode<synchronous>, transform_indices = @transform_6, window_bounds = array<i64: 256, 384>}, {pipeline_mode = #tpu.pipeline_mode<synchronous>, transform_indices = @transform_7, window_bounds = array<i64: 384, 640>}, {pipeline_mode = #tpu.pipeline_mode<synchronous>, transform_indices = @transform_8, window_bounds = array<i64: 640, 128>}, {transform_indices = @transform_9, window_bounds = array<i64: 8, 128>}]} {
    %c0 = arith.constant 0 : index
    %c0_0 = arith.constant 0 : index
    %0 = vector.load %arg1[%c0, %c0_0] : memref<8x128xf32, #tpu.memory_space<vmem>>, vector<8x128xf32>
    %c0_1 = arith.constant 0 : index
    %c0_2 = arith.constant 0 : index
    %1 = vector.load %arg3[%c0_1, %c0_2] : memref<128x128xf32, #tpu.memory_space<vmem>>, vector<128x128xf32>
    %cst = arith.constant dense<0.000000e+00> : vector<8x128xf32>
    %2 = tpu.matmul %0, %1, %cst {dimension_numbers = #tpu.dot_dimension_numbers<[1], [0], [0], [1], [0, 0, 1, 1], [], []>} : vector<8x128xf32>, vector<128x128xf32>, vector<8x128xf32> -> vector<8x128xf32>
    %c0_3 = arith.constant 0 : index
    %c0_4 = arith.constant 0 : index
    %3 = vector.load %arg2[%c0_3, %c0_4] : memref<8x640xf32, #tpu.memory_space<vmem>>, vector<1x128xf32>
    %4 = vector.broadcast %3 : vector<1x128xf32> to vector<8x128xf32>
    %5 = arith.addf %2, %4 : vector<8x128xf32>
    %cst_5 = arith.constant 0.000000e+00 : f32
    %6 = vector.broadcast %cst_5 : f32 to vector<8x128xf32>
    %7 = arith.maximumf %5, %6 : vector<8x128xf32>
    %c0_6 = arith.constant 0 : index
    %c0_7 = arith.constant 0 : index
    %8 = vector.load %arg4[%c0_6, %c0_7] : memref<128x128xf32, #tpu.memory_space<vmem>>, vector<128x128xf32>
    %cst_8 = arith.constant dense<0.000000e+00> : vector<8x128xf32>
    %9 = tpu.matmul %7, %8, %cst_8 {dimension_numbers = #tpu.dot_dimension_numbers<[1], [0], [0], [1], [0, 0, 1, 1], [], []>} : vector<8x128xf32>, vector<128x128xf32>, vector<8x128xf32> -> vector<8x128xf32>
    %c1 = arith.constant 1 : index
    %c0_9 = arith.constant 0 : index
    %10 = vector.load %arg2[%c1, %c0_9] : memref<8x640xf32, #tpu.memory_space<vmem>>, vector<1x128xf32>
    %11 = vector.broadcast %10 : vector<1x128xf32> to vector<8x128xf32>
    %12 = arith.addf %9, %11 : vector<8x128xf32>
    %cst_10 = arith.constant 0.000000e+00 : f32
    %13 = vector.broadcast %cst_10 : f32 to vector<8x128xf32>
    %14 = arith.maximumf %12, %13 : vector<8x128xf32>
    %c0_11 = arith.constant 0 : index
    %c0_12 = arith.constant 0 : index
    %15 = vector.load %arg5[%c0_11, %c0_12] : memref<128x128xf32, #tpu.memory_space<vmem>>, vector<128x128xf32>
    %cst_13 = arith.constant dense<0.000000e+00> : vector<8x128xf32>
    %16 = tpu.matmul %14, %15, %cst_13 {dimension_numbers = #tpu.dot_dimension_numbers<[1], [0], [0], [1], [0, 0, 1, 1], [], []>} : vector<8x128xf32>, vector<128x128xf32>, vector<8x128xf32> -> vector<8x128xf32>
    %c2 = arith.constant 2 : index
    %c0_14 = arith.constant 0 : index
    %17 = vector.load %arg2[%c2, %c0_14] : memref<8x640xf32, #tpu.memory_space<vmem>>, vector<1x128xf32>
    %18 = vector.broadcast %17 : vector<1x128xf32> to vector<8x128xf32>
    %19 = arith.addf %16, %18 : vector<8x128xf32>
    %cst_15 = arith.constant 0.000000e+00 : f32
    %20 = vector.broadcast %cst_15 : f32 to vector<8x128xf32>
    %21 = arith.maximumf %19, %20 : vector<8x128xf32>
    %c0_16 = arith.constant 0 : index
    %c0_17 = arith.constant 0 : index
    %22 = vector.load %arg6[%c0_16, %c0_17] : memref<128x256xf32, #tpu.memory_space<vmem>>, vector<128x256xf32>
    %cst_18 = arith.constant dense<0.000000e+00> : vector<8x256xf32>
    %23 = tpu.matmul %21, %22, %cst_18 {dimension_numbers = #tpu.dot_dimension_numbers<[1], [0], [0], [1], [0, 0, 1, 1], [], []>} : vector<8x128xf32>, vector<128x256xf32>, vector<8x256xf32> -> vector<8x256xf32>
    %c3 = arith.constant 3 : index
    %c0_19 = arith.constant 0 : index
    %24 = vector.load %arg2[%c3, %c0_19] : memref<8x640xf32, #tpu.memory_space<vmem>>, vector<1x256xf32>
    %25 = vector.broadcast %24 : vector<1x256xf32> to vector<8x256xf32>
    %26 = arith.addf %23, %25 : vector<8x256xf32>
    %cst_20 = arith.constant 0.000000e+00 : f32
    %27 = vector.broadcast %cst_20 : f32 to vector<8x256xf32>
    %28 = arith.maximumf %26, %27 : vector<8x256xf32>
    %c0_21 = arith.constant 0 : index
    %c0_22 = arith.constant 0 : index
    %29 = vector.load %arg7[%c0_21, %c0_22] : memref<256x384xf32, #tpu.memory_space<vmem>>, vector<256x384xf32>
    %cst_23 = arith.constant dense<0.000000e+00> : vector<8x384xf32>
    %30 = tpu.matmul %28, %29, %cst_23 {dimension_numbers = #tpu.dot_dimension_numbers<[1], [0], [0], [1], [0, 0, 1, 1], [], []>} : vector<8x256xf32>, vector<256x384xf32>, vector<8x384xf32> -> vector<8x384xf32>
    %c4 = arith.constant 4 : index
    %c0_24 = arith.constant 0 : index
    %31 = vector.load %arg2[%c4, %c0_24] : memref<8x640xf32, #tpu.memory_space<vmem>>, vector<1x384xf32>
    %32 = vector.broadcast %31 : vector<1x384xf32> to vector<8x384xf32>
    %33 = arith.addf %30, %32 : vector<8x384xf32>
    %cst_25 = arith.constant 0.000000e+00 : f32
    %34 = vector.broadcast %cst_25 : f32 to vector<8x384xf32>
    %35 = arith.maximumf %33, %34 : vector<8x384xf32>
    %c0_26 = arith.constant 0 : index
    %c0_27 = arith.constant 0 : index
    %36 = vector.load %arg8[%c0_26, %c0_27] : memref<384x640xf32, #tpu.memory_space<vmem>>, vector<384x640xf32>
    %cst_28 = arith.constant dense<0.000000e+00> : vector<8x640xf32>
    %37 = tpu.matmul %35, %36, %cst_28 {dimension_numbers = #tpu.dot_dimension_numbers<[1], [0], [0], [1], [0, 0, 1, 1], [], []>} : vector<8x384xf32>, vector<384x640xf32>, vector<8x640xf32> -> vector<8x640xf32>
    %c5 = arith.constant 5 : index
    %c0_29 = arith.constant 0 : index
    %38 = vector.load %arg2[%c5, %c0_29] : memref<8x640xf32, #tpu.memory_space<vmem>>, vector<1x640xf32>
    %39 = vector.broadcast %38 : vector<1x640xf32> to vector<8x640xf32>
    %40 = arith.addf %37, %39 : vector<8x640xf32>
    %cst_30 = arith.constant 0.000000e+00 : f32
    %41 = vector.broadcast %cst_30 : f32 to vector<8x640xf32>
    %42 = arith.maximumf %40, %41 : vector<8x640xf32>
    %c0_31 = arith.constant 0 : index
    %c0_32 = arith.constant 0 : index
    %43 = vector.load %arg9[%c0_31, %c0_32] : memref<640x128xf32, #tpu.memory_space<vmem>>, vector<640x128xf32>
    %cst_33 = arith.constant dense<0.000000e+00> : vector<8x128xf32>
    %44 = tpu.matmul %42, %43, %cst_33 {dimension_numbers = #tpu.dot_dimension_numbers<[1], [0], [0], [1], [0, 0, 1, 1], [], []>} : vector<8x640xf32>, vector<640x128xf32>, vector<8x128xf32> -> vector<8x128xf32>
    %c6 = arith.constant 6 : index
    %c0_34 = arith.constant 0 : index
    %45 = vector.load %arg2[%c6, %c0_34] : memref<8x640xf32, #tpu.memory_space<vmem>>, vector<1x128xf32>
    %46 = vector.broadcast %45 : vector<1x128xf32> to vector<8x128xf32>
    %47 = arith.addf %44, %46 : vector<8x128xf32>
    %c0_35 = arith.constant 0 : index
    %c0_36 = arith.constant 0 : index
    %48 = vector.load %arg10[%c0_35, %c0_36] : memref<8x128xf32, #tpu.memory_space<vmem>>, vector<8x128xf32>
    tpu.vector_store %arg10[%c0_35, %c0_36], %47 {strides = array<i32>} : memref<8x128xf32, #tpu.memory_space<vmem>>, vector<8x128xf32>,
    return
  }
  func.func @transform_0(%arg0: i32) -> (i32, i32) {
    %c0_i32 = arith.constant 0 : i32
    %c0_i32_0 = arith.constant 0 : i32
    return %arg0, %c0_i32 : i32, i32
  }
  func.func @transform_1(%arg0: i32) -> (i32, i32) {
    %c0_i32 = arith.constant 0 : i32
    %c0_i32_0 = arith.constant 0 : i32
    %c0_i32_1 = arith.constant 0 : i32
    return %c0_i32, %c0_i32_0 : i32, i32
  }
  func.func @transform_2(%arg0: i32) -> (i32, i32) {
    %c0_i32 = arith.constant 0 : i32
    %c0_i32_0 = arith.constant 0 : i32
    %c0_i32_1 = arith.constant 0 : i32
    return %c0_i32, %c0_i32_0 : i32, i32
  }
  func.func @transform_3(%arg0: i32) -> (i32, i32) {
    %c0_i32 = arith.constant 0 : i32
    %c0_i32_0 = arith.constant 0 : i32
    %c0_i32_1 = arith.constant 0 : i32
    return %c0_i32, %c0_i32_0 : i32, i32
  }
  func.func @transform_4(%arg0: i32) -> (i32, i32) {
    %c0_i32 = arith.constant 0 : i32
    %c0_i32_0 = arith.constant 0 : i32
    %c0_i32_1 = arith.constant 0 : i32
    return %c0_i32, %c0_i32_0 : i32, i32
  }
  func.func @transform_5(%arg0: i32) -> (i32, i32) {
    %c0_i32 = arith.constant 0 : i32
    %c0_i32_0 = arith.constant 0 : i32
    %c0_i32_1 = arith.constant 0 : i32
    return %c0_i32, %c0_i32_0 : i32, i32
  }
  func.func @transform_6(%arg0: i32) -> (i32, i32) {
    %c0_i32 = arith.constant 0 : i32
    %c0_i32_0 = arith.constant 0 : i32
    %c0_i32_1 = arith.constant 0 : i32
    return %c0_i32, %c0_i32_0 : i32, i32
  }
  func.func @transform_7(%arg0: i32) -> (i32, i32) {
    %c0_i32 = arith.constant 0 : i32
    %c0_i32_0 = arith.constant 0 : i32
    %c0_i32_1 = arith.constant 0 : i32
    return %c0_i32, %c0_i32_0 : i32, i32
  }
  func.func @transform_8(%arg0: i32) -> (i32, i32) {
    %c0_i32 = arith.constant 0 : i32
    %c0_i32_0 = arith.constant 0 : i32
    %c0_i32_1 = arith.constant 0 : i32
    return %c0_i32, %c0_i32_0 : i32, i32
  }
  func.func @transform_9(%arg0: i32) -> (i32, i32) {
    %c0_i32 = arith.constant 0 : i32
    %c0_i32_0 = arith.constant 0 : i32
    return %arg0, %c0_i32 : i32, i32
  }
}

</mosaic_0001>

<llo_original>
// kernel: net_forward.1
$region0: #{net_forward.1}
  #allocation0 [shape = 'u32[]', space=smem, size = 0x4, offset = 0x4, fixed_abs, tag = 'smem constant byte address 0x4 - core index']
  #allocation1 [shape = 'u32[144,128]{1,0:T(1,128)}', space=vmem, size = 0x12000, scoped, tag = 'internal scratch']
  %s0 = inlined_call_operand.vmem [shape: f32[8,128], index: 0, kind: input, shape index: {}]
  %s1 = inlined_call_operand.vmem [shape: f32[8,640], index: 1, kind: input, shape index: {}]
  %s2 = inlined_call_operand.vmem [shape: f32[128,128], index: 2, kind: input, shape index: {}]
  %s3 = inlined_call_operand.vmem [shape: f32[128,128], index: 3, kind: input, shape index: {}]
  %s4 = inlined_call_operand.vmem [shape: f32[128,128], index: 4, kind: input, shape index: {}]
  %s5 = inlined_call_operand.vmem [shape: f32[128,256], index: 5, kind: input, shape index: {}]
  %s6 = inlined_call_operand.vmem [shape: f32[256,384], index: 6, kind: input, shape index: {}]
  %s7 = inlined_call_operand.vmem [shape: f32[384,640], index: 7, kind: input, shape index: {}]
  %s8 = inlined_call_operand.vmem [shape: f32[640,128], index: 8, kind: input, shape index: {}]
  %s9 = inlined_call_operand.vmem [shape: f32[8,128], index: 9, kind: output, shape index: {}]
  %s10 = sld [smem:[#allocation0]]
  $region46: #{net_forward.1} parent=0
    _
  %s12 = ssub.s32 1, %s10
  %s13 = scalar_select 0, %s12, %s10
  // Predicated region
  $region2: #{net_forward.1} parent=0 // pred_check
    _
  $region3: #{net_forward.1} parent=0 // pred_check_branch
    %15 = sbr.rel (0) target = $region5
  $region4: #{net_forward.1} parent=0 // pred_region
    _
  $region5: #{net_forward.1} parent=0 // pred_fallthru
    _
  // Predicated region
  $region6: #{net_forward.1} parent=0 // pred_check
    _
  $region7: #{net_forward.1} parent=0 // pred_check_branch
    %17 = sbr.rel (0) target = $region9
  $region8: #{net_forward.1} parent=0 // pred_region
    _
  $region9: #{net_forward.1} parent=0 // pred_fallthru
    _
  // Predicated region
  $region10: #{net_forward.1} parent=0 // pred_check
    _
  $region11: #{net_forward.1} parent=0 // pred_check_branch
    %19 = sbr.rel (0) target = $region13
  $region12: #{net_forward.1} parent=0 // pred_region
    _
  $region13: #{net_forward.1} parent=0 // pred_fallthru
    _
  // Predicated region
  $region14: #{net_forward.1} parent=0 // pred_check
    _
  $region15: #{net_forward.1} parent=0 // pred_check_branch
    %21 = sbr.rel (0) target = $region17
  $region16: #{net_forward.1} parent=0 // pred_region
    _
  $region17: #{net_forward.1} parent=0 // pred_fallthru
    _
  // Predicated region
  $region18: #{net_forward.1} parent=0 // pred_check
    _
  $region19: #{net_forward.1} parent=0 // pred_check_branch
    %23 = sbr.rel (0) target = $region21
  $region20: #{net_forward.1} parent=0 // pred_region
    _
  $region21: #{net_forward.1} parent=0 // pred_fallthru
    _
  // Predicated region
  $region22: #{net_forward.1} parent=0 // pred_check
    _
  $region23: #{net_forward.1} parent=0 // pred_check_branch
    %25 = sbr.rel (0) target = $region25
  $region24: #{net_forward.1} parent=0 // pred_region
    _
  $region25: #{net_forward.1} parent=0 // pred_fallthru
    _
  // Predicated region
  $region26: #{net_forward.1} parent=0 // pred_check
    _
  $region27: #{net_forward.1} parent=0 // pred_check_branch
    %27 = sbr.rel (0) target = $region29
  $region28: #{net_forward.1} parent=0 // pred_region
    _
  $region29: #{net_forward.1} parent=0 // pred_fallthru
    _
  // Predicated region
  $region30: #{net_forward.1} parent=0 // pred_check
    _
  $region31: #{net_forward.1} parent=0 // pred_check_branch
    %29 = sbr.rel (0) target = $region33
  $region32: #{net_forward.1} parent=0 // pred_region
    _
  $region33: #{net_forward.1} parent=0 // pred_fallthru
    _
  // Predicated region
  $region34: #{net_forward.1} parent=0 // pred_check
    _
  $region35: #{net_forward.1} parent=0 // pred_check_branch
    %31 = sbr.rel (0) target = $region37
  $region36: #{net_forward.1} parent=0 // pred_region
    _
  $region37: #{net_forward.1} parent=0 // pred_fallthru
    _
  %v32 = vld [vmem:[%s0] sm:$0xff]
  %v33 = vld [vmem:[%s2] sm:$0xff]
  %v34 = vld [vmem:[%s2 + $0x8] sm:$0xff]
  %v35 = vld [vmem:[%s2 + $0x10] sm:$0xff]
  %v36 = vld [vmem:[%s2 + $0x18] sm:$0xff]
  %v37 = vld [vmem:[%s2 + $0x20] sm:$0xff]
  %v38 = vld [vmem:[%s2 + $0x28] sm:$0xff]
  %v39 = vld [vmem:[%s2 + $0x30] sm:$0xff]
  %v40 = vld [vmem:[%s2 + $0x38] sm:$0xff]
  %v41 = vld [vmem:[%s2 + $0x40] sm:$0xff]
  %v42 = vld [vmem:[%s2 + $0x48] sm:$0xff]
  %v43 = vld [vmem:[%s2 + $0x50] sm:$0xff]
  %v44 = vld [vmem:[%s2 + $0x58] sm:$0xff]
  %v45 = vld [vmem:[%s2 + $0x60] sm:$0xff]
  %v46 = vld [vmem:[%s2 + $0x68] sm:$0xff]
  %v47 = vld [vmem:[%s2 + $0x70] sm:$0xff]
  %v48 = vld [vmem:[%s2 + $0x78] sm:$0xff]
  %v49 = vld [vmem:[%s1] ss:$0 sm:$0xff]
  %50 = vmatprep.subr.mxu0 0.0
  %51 = vmatpush1.msra.mxu0 %v33
  %52 = vmatprep.subr.mxu0 0.0
  %53 = vmatpush1.msra.mxu0 %v34
  %54 = vmatprep.subr.mxu0 0.0
  %55 = vmatpush1.msra.mxu0 %v35
  %56 = vmatprep.subr.mxu0 0.0
  %57 = vmatpush1.msra.mxu0 %v36
  %58 = vmatprep.subr.mxu0 0.0
  %59 = vmatpush1.msra.mxu0 %v37
  %60 = vmatprep.subr.mxu0 0.0
  %61 = vmatpush1.msra.mxu0 %v38
  %62 = vmatprep.subr.mxu0 0.0
  %63 = vmatpush1.msra.mxu0 %v39
  %64 = vmatprep.subr.mxu0 0.0
  %65 = vmatpush1.msra.mxu0 %v40
  %66 = vmatprep.subr.mxu0 0.0
  %67 = vmatpush1.msra.mxu0 %v41
  %68 = vmatprep.subr.mxu0 0.0
  %69 = vmatpush1.msra.mxu0 %v42
  %70 = vmatprep.subr.mxu0 0.0
  %71 = vmatpush1.msra.mxu0 %v43
  %72 = vmatprep.subr.mxu0 0.0
  %73 = vmatpush1.msra.mxu0 %v44
  %74 = vmatprep.subr.mxu0 0.0
  %75 = vmatpush1.msra.mxu0 %v45
  %76 = vmatprep.subr.mxu0 0.0
  %77 = vmatpush1.msra.mxu0 %v46
  %78 = vmatprep.subr.mxu0 0.0
  %79 = vmatpush1.msra.mxu0 %v47
  %80 = vmatprep.subr.mxu0 0.0
  %81 = vmatpush1.msra.mxu0 %v48
  %82 = vmatprep.subr.mxu0 0.0
  %83 = vmatpush1.msra.mxu0 0.0
  %84 = vmatprep.subr.mxu0 0.0
  %85 = vmatpush1.msra.mxu0 0.0
  %86 = vmatprep.subr.mxu0 0.0
  %87 = vmatpush1.msra.mxu0 0.0
  %88 = vmatprep.subr.mxu0 0.0
  %89 = vmatpush1.msra.mxu0 0.0
  %90 = vmatprep.subr.mxu0 0.0
  %91 = vmatpush1.msra.mxu0 0.0
  %92 = vmatprep.subr.mxu0 0.0
  %93 = vmatpush1.msra.mxu0 0.0
  %94 = vmatprep.subr.mxu0 0.0
  %95 = vmatpush1.msra.mxu0 0.0
  %96 = vmatprep.subr.mxu0 0.0
  %97 = vmatpush1.msra.mxu0 0.0
  %98 = vmatprep.subr.mxu0 0.0
  %99 = vmatpush1.msra.mxu0 0.0
  %100 = vmatprep.subr.mxu0 0.0
  %101 = vmatpush1.msra.mxu0 0.0
  %102 = vmatprep.subr.mxu0 0.0
  %103 = vmatpush1.msra.mxu0 0.0
  %104 = vmatprep.subr.mxu0 0.0
  %105 = vmatpush1.msra.mxu0 0.0
  %106 = vmatprep.subr.mxu0 0.0
  %107 = vmatpush1.msra.mxu0 0.0
  %108 = vmatprep.subr.mxu0 0.0
  %109 = vmatpush1.msra.mxu0 0.0
  %110 = vmatprep.subr.mxu0 0.0
  %111 = vmatpush1.msra.mxu0 0.0
  %112 = vmatprep.subr.mxu0 0.0
  %113 = vmatpush1.msra.mxu0 0.0
  %114 = vmatprep.mubr.f32.mxu0 0.0
  %115 = vmatmul.mubr.f32.gmra.mrb[0].mxu0 %v32
  %v116 = vpop.f32.mrb[0].mxu0
  %v117 = vadd.f32 %v49, %v116
  %v118 = vpop.f32.mrb[0].mxu0
  %119 = vdwg.mxu0
  %v120 = vmax.f32 %v117, 0.0
  %v121 = vld [vmem:[%s3] sm:$0xff]
  %v122 = vld [vmem:[%s3 + $0x8] sm:$0xff]
  %v123 = vld [vmem:[%s3 + $0x10] sm:$0xff]
  %v124 = vld [vmem:[%s3 + $0x18] sm:$0xff]
  %v125 = vld [vmem:[%s3 + $0x20] sm:$0xff]
  %v126 = vld [vmem:[%s3 + $0x28] sm:$0xff]
  %v127 = vld [vmem:[%s3 + $0x30] sm:$0xff]
  %v128 = vld [vmem:[%s3 + $0x38] sm:$0xff]
  %v129 = vld [vmem:[%s3 + $0x40] sm:$0xff]
  %v130 = vld [vmem:[%s3 + $0x48] sm:$0xff]
  %v131 = vld [vmem:[%s3 + $0x50] sm:$0xff]
  %v132 = vld [vmem:[%s3 + $0x58] sm:$0xff]
  %v133 = vld [vmem:[%s3 + $0x60] sm:$0xff]
  %v134 = vld [vmem:[%s3 + $0x68] sm:$0xff]
  %v135 = vld [vmem:[%s3 + $0x70] sm:$0xff]
  %v136 = vld [vmem:[%s3 + $0x78] sm:$0xff]
  %v137 = vld [vmem:[%s1 + $0x1] ss:$0 sm:$0xff]
  %138 = vmatprep.subr.mxu0 0.0
  %139 = vmatpush1.msra.mxu0 %v121
  %140 = vmatprep.subr.mxu0 0.0
  %141 = vmatpush1.msra.mxu0 %v122
  %142 = vmatprep.subr.mxu0 0.0
  %143 = vmatpush1.msra.mxu0 %v123
  %144 = vmatprep.subr.mxu0 0.0
  %145 = vmatpush1.msra.mxu0 %v124
  %146 = vmatprep.subr.mxu0 0.0
  %147 = vmatpush1.msra.mxu0 %v125
  %148 = vmatprep.subr.mxu0 0.0
  %149 = vmatpush1.msra.mxu0 %v126
  %150 = vmatprep.subr.mxu0 0.0
  %151 = vmatpush1.msra.mxu0 %v127
  %152 = vmatprep.subr.mxu0 0.0
  %153 = vmatpush1.msra.mxu0 %v128
  %154 = vmatprep.subr.mxu0 0.0
  %155 = vmatpush1.msra.mxu0 %v129
  %156 = vmatprep.subr.mxu0 0.0
  %157 = vmatpush1.msra.mxu0 %v130
  %158 = vmatprep.subr.mxu0 0.0
  %159 = vmatpush1.msra.mxu0 %v131
  %160 = vmatprep.subr.mxu0 0.0
  %161 = vmatpush1.msra.mxu0 %v132
  %162 = vmatprep.subr.mxu0 0.0
  %163 = vmatpush1.msra.mxu0 %v133
  %164 = vmatprep.subr.mxu0 0.0
  %165 = vmatpush1.msra.mxu0 %v134
  %166 = vmatprep.subr.mxu0 0.0
  %167 = vmatpush1.msra.mxu0 %v135
  %168 = vmatprep.subr.mxu0 0.0
  %169 = vmatpush1.msra.mxu0 %v136
  %170 = vmatprep.subr.mxu0 0.0
  %171 = vmatpush1.msra.mxu0 0.0
  %172 = vmatprep.subr.mxu0 0.0
  %173 = vmatpush1.msra.mxu0 0.0
  %174 = vmatprep.subr.mxu0 0.0
  %175 = vmatpush1.msra.mxu0 0.0
  %176 = vmatprep.subr.mxu0 0.0
  %177 = vmatpush1.msra.mxu0 0.0
  %178 = vmatprep.subr.mxu0 0.0
  %179 = vmatpush1.msra.mxu0 0.0
  %180 = vmatprep.subr.mxu0 0.0
  %181 = vmatpush1.msra.mxu0 0.0
  %182 = vmatprep.subr.mxu0 0.0
  %183 = vmatpush1.msra.mxu0 0.0
  %184 = vmatprep.subr.mxu0 0.0
  %185 = vmatpush1.msra.mxu0 0.0
  %186 = vmatprep.subr.mxu0 0.0
  %187 = vmatpush1.msra.mxu0 0.0
  %188 = vmatprep.subr.mxu0 0.0
  %189 = vmatpush1.msra.mxu0 0.0
  %190 = vmatprep.subr.mxu0 0.0
  %191 = vmatpush1.msra.mxu0 0.0
  %192 = vmatprep.subr.mxu0 0.0
  %193 = vmatpush1.msra.mxu0 0.0
  %194 = vmatprep.subr.mxu0 0.0
  %195 = vmatpush1.msra.mxu0 0.0
  %196 = vmatprep.subr.mxu0 0.0
  %197 = vmatpush1.msra.mxu0 0.0
  %198 = vmatprep.subr.mxu0 0.0
  %199 = vmatpush1.msra.mxu0 0.0
  %200 = vmatprep.subr.mxu0 0.0
  %201 = vmatpush1.msra.mxu0 0.0
  %202 = vmatprep.mubr.f32.mxu0 0.0
  %203 = vmatmul.mubr.f32.gmra.mrb[0].mxu0 %v120
  %v204 = vpop.f32.mrb[0].mxu0
  %v205 = vadd.f32 %v137, %v204
  %v206 = vpop.f32.mrb[0].mxu0
  %207 = vdwg.mxu0
  %v208 = vmax.f32 %v205, 0.0
  %v209 = vld [vmem:[%s4] sm:$0xff]
  %v210 = vld [vmem:[%s4 + $0x8] sm:$0xff]
  %v211 = vld [vmem:[%s4 + $0x10] sm:$0xff]
  %v212 = vld [vmem:[%s4 + $0x18] sm:$0xff]
  %v213 = vld [vmem:[%s4 + $0x20] sm:$0xff]
  %v214 = vld [vmem:[%s4 + $0x28] sm:$0xff]
  %v215 = vld [vmem:[%s4 + $0x30] sm:$0xff]
  %v216 = vld [vmem:[%s4 + $0x38] sm:$0xff]
  %v217 = vld [vmem:[%s4 + $0x40] sm:$0xff]
  %v218 = vld [vmem:[%s4 + $0x48] sm:$0xff]
  %v219 = vld [vmem:[%s4 + $0x50] sm:$0xff]
  %v220 = vld [vmem:[%s4 + $0x58] sm:$0xff]
  %v221 = vld [vmem:[%s4 + $0x60] sm:$0xff]
  %v222 = vld [vmem:[%s4 + $0x68] sm:$0xff]
  %v223 = vld [vmem:[%s4 + $0x70] sm:$0xff]
  %v224 = vld [vmem:[%s4 + $0x78] sm:$0xff]
  %v225 = vld [vmem:[%s1 + $0x2] ss:$0 sm:$0xff]
  %226 = vmatprep.subr.mxu0 0.0
  %227 = vmatpush1.msra.mxu0 %v209
  %228 = vmatprep.subr.mxu0 0.0
  %229 = vmatpush1.msra.mxu0 %v210
  %230 = vmatprep.subr.mxu0 0.0
  %231 = vmatpush1.msra.mxu0 %v211
  %232 = vmatprep.subr.mxu0 0.0
  %233 = vmatpush1.msra.mxu0 %v212
  %234 = vmatprep.subr.mxu0 0.0
  %235 = vmatpush1.msra.mxu0 %v213
  %236 = vmatprep.subr.mxu0 0.0
  %237 = vmatpush1.msra.mxu0 %v214
  %238 = vmatprep.subr.mxu0 0.0
  %239 = vmatpush1.msra.mxu0 %v215
  %240 = vmatprep.subr.mxu0 0.0
  %241 = vmatpush1.msra.mxu0 %v216
  %242 = vmatprep.subr.mxu0 0.0
  %243 = vmatpush1.msra.mxu0 %v217
  %244 = vmatprep.subr.mxu0 0.0
  %245 = vmatpush1.msra.mxu0 %v218
  %246 = vmatprep.subr.mxu0 0.0
  %247 = vmatpush1.msra.mxu0 %v219
  %248 = vmatprep.subr.mxu0 0.0
  %249 = vmatpush1.msra.mxu0 %v220
  %250 = vmatprep.subr.mxu0 0.0
  %251 = vmatpush1.msra.mxu0 %v221
  %252 = vmatprep.subr.mxu0 0.0
  %253 = vmatpush1.msra.mxu0 %v222
  %254 = vmatprep.subr.mxu0 0.0
  %255 = vmatpush1.msra.mxu0 %v223
  %256 = vmatprep.subr.mxu0 0.0
  %257 = vmatpush1.msra.mxu0 %v224
  %258 = vmatprep.subr.mxu0 0.0
  %259 = vmatpush1.msra.mxu0 0.0
  %260 = vmatprep.subr.mxu0 0.0
  %261 = vmatpush1.msra.mxu0 0.0
  %262 = vmatprep.subr.mxu0 0.0
  %263 = vmatpush1.msra.mxu0 0.0
  %264 = vmatprep.subr.mxu0 0.0
  %265 = vmatpush1.msra.mxu0 0.0
  %266 = vmatprep.subr.mxu0 0.0
  %267 = vmatpush1.msra.mxu0 0.0
  %268 = vmatprep.subr.mxu0 0.0
  %269 = vmatpush1.msra.mxu0 0.0
  %270 = vmatprep.subr.mxu0 0.0
  %271 = vmatpush1.msra.mxu0 0.0
  %272 = vmatprep.subr.mxu0 0.0
  %273 = vmatpush1.msra.mxu0 0.0
  %274 = vmatprep.subr.mxu0 0.0
  %275 = vmatpush1.msra.mxu0 0.0
  %276 = vmatprep.subr.mxu0 0.0
  %277 = vmatpush1.msra.mxu0 0.0
  %278 = vmatprep.subr.mxu0 0.0
  %279 = vmatpush1.msra.mxu0 0.0
  %280 = vmatprep.subr.mxu0 0.0
  %281 = vmatpush1.msra.mxu0 0.0
  %282 = vmatprep.subr.mxu0 0.0
  %283 = vmatpush1.msra.mxu0 0.0
  %284 = vmatprep.subr.mxu0 0.0
  %285 = vmatpush1.msra.mxu0 0.0
  %286 = vmatprep.subr.mxu0 0.0
  %287 = vmatpush1.msra.mxu0 0.0
  %288 = vmatprep.subr.mxu0 0.0
  %289 = vmatpush1.msra.mxu0 0.0
  %290 = vmatprep.mubr.f32.mxu0 0.0
  %291 = vmatmul.mubr.f32.gmra.mrb[0].mxu0 %v208
  %v292 = vpop.f32.mrb[0].mxu0
  %v293 = vadd.f32 %v225, %v292
  %v294 = vpop.f32.mrb[0].mxu0
  %295 = vdwg.mxu0
  %v296 = vmax.f32 %v293, 0.0
  %v297 = vld [vmem:[%s5] sm:$0xff]
  %v298 = vld [vmem:[%s5 + $0x8] sm:$0xff]
  %v299 = vld [vmem:[%s5 + $0x10] sm:$0xff]
  %v300 = vld [vmem:[%s5 + $0x18] sm:$0xff]
  %v301 = vld [vmem:[%s5 + $0x20] sm:$0xff]
  %v302 = vld [vmem:[%s5 + $0x28] sm:$0xff]
  %v303 = vld [vmem:[%s5 + $0x30] sm:$0xff]
  %v304 = vld [vmem:[%s5 + $0x38] sm:$0xff]
  %v305 = vld [vmem:[%s5 + $0x40] sm:$0xff]
  %v306 = vld [vmem:[%s5 + $0x48] sm:$0xff]
  %v307 = vld [vmem:[%s5 + $0x50] sm:$0xff]
  %v308 = vld [vmem:[%s5 + $0x58] sm:$0xff]
  %v309 = vld [vmem:[%s5 + $0x60] sm:$0xff]
  %v310 = vld [vmem:[%s5 + $0x68] sm:$0xff]
  %v311 = vld [vmem:[%s5 + $0x70] sm:$0xff]
  %v312 = vld [vmem:[%s5 + $0x78] sm:$0xff]
  %v313 = vld [vmem:[%s5 + $0x80] sm:$0xff]
  %v314 = vld [vmem:[%s5 + $0x88] sm:$0xff]
  %v315 = vld [vmem:[%s5 + $0x90] sm:$0xff]
  %v316 = vld [vmem:[%s5 + $0x98] sm:$0xff]
  %v317 = vld [vmem:[%s5 + $0xa0] sm:$0xff]
  %v318 = vld [vmem:[%s5 + $0xa8] sm:$0xff]
  %v319 = vld [vmem:[%s5 + $0xb0] sm:$0xff]
  %v320 = vld [vmem:[%s5 + $0xb8] sm:$0xff]
  %v321 = vld [vmem:[%s5 + $0xc0] sm:$0xff]
  %v322 = vld [vmem:[%s5 + $0xc8] sm:$0xff]
  %v323 = vld [vmem:[%s5 + $0xd0] sm:$0xff]
  %v324 = vld [vmem:[%s5 + $0xd8] sm:$0xff]
  %v325 = vld [vmem:[%s5 + $0xe0] sm:$0xff]
  %v326 = vld [vmem:[%s5 + $0xe8] sm:$0xff]
  %v327 = vld [vmem:[%s5 + $0xf0] sm:$0xff]
  %v328 = vld [vmem:[%s5 + $0xf8] sm:$0xff]
  %s329 = scalar_lea.vmem %s1, 3
  %v330 = vld [vmem:[%s329] ss:$8 sm:$0x3]
  %v332 = vlaneseq
  %v333 = vshrl.u32 %v332, 7
  %v334 = vsub.s32 0, %v333
  %v335 = vrot.slane %v330, %v334
  %v336 = vlaneseq
  %v337 = vshrl.u32 %v336, 7
  %v338 = vsub.s32 1, %v337
  %v339 = vrot.slane %v330, %v338
  %342 = vmatprep.subr.mxu0 %v298
  %343 = vmatpush1.msra.mxu0 %v297
  %344 = vmatprep.subr.mxu0 %v300
  %345 = vmatpush1.msra.mxu0 %v299
  %346 = vmatprep.subr.mxu0 %v302
  %347 = vmatpush1.msra.mxu0 %v301
  %348 = vmatprep.subr.mxu0 %v304
  %349 = vmatpush1.msra.mxu0 %v303
  %350 = vmatprep.subr.mxu0 %v306
  %351 = vmatpush1.msra.mxu0 %v305
  %352 = vmatprep.subr.mxu0 %v308
  %353 = vmatpush1.msra.mxu0 %v307
  %354 = vmatprep.subr.mxu0 %v310
  %355 = vmatpush1.msra.mxu0 %v309
  %356 = vmatprep.subr.mxu0 %v312
  %357 = vmatpush1.msra.mxu0 %v311
  %358 = vmatprep.subr.mxu0 %v314
  %359 = vmatpush1.msra.mxu0 %v313
  %360 = vmatprep.subr.mxu0 %v316
  %361 = vmatpush1.msra.mxu0 %v315
  %362 = vmatprep.subr.mxu0 %v318
  %363 = vmatpush1.msra.mxu0 %v317
  %364 = vmatprep.subr.mxu0 %v320
  %365 = vmatpush1.msra.mxu0 %v319
  %366 = vmatprep.subr.mxu0 %v322
  %367 = vmatpush1.msra.mxu0 %v321
  %368 = vmatprep.subr.mxu0 %v324
  %369 = vmatpush1.msra.mxu0 %v323
  %370 = vmatprep.subr.mxu0 %v326
  %371 = vmatpush1.msra.mxu0 %v325
  %372 = vmatprep.subr.mxu0 %v328
  %373 = vmatpush1.msra.mxu0 %v327
  %374 = vmatprep.subr.mxu0 0.0
  %375 = vmatpush1.msra.mxu0 0.0
  %376 = vmatprep.subr.mxu0 0.0
  %377 = vmatpush1.msra.mxu0 0.0
  %378 = vmatprep.subr.mxu0 0.0
  %379 = vmatpush1.msra.mxu0 0.0
  %380 = vmatprep.subr.mxu0 0.0
  %381 = vmatpush1.msra.mxu0 0.0
  %382 = vmatprep.subr.mxu0 0.0
  %383 = vmatpush1.msra.mxu0 0.0
  %384 = vmatprep.subr.mxu0 0.0
  %385 = vmatpush1.msra.mxu0 0.0
  %386 = vmatprep.subr.mxu0 0.0
  %387 = vmatpush1.msra.mxu0 0.0
  %388 = vmatprep.subr.mxu0 0.0
  %389 = vmatpush1.msra.mxu0 0.0
  %390 = vmatprep.subr.mxu0 0.0
  %391 = vmatpush1.msra.mxu0 0.0
  %392 = vmatprep.subr.mxu0 0.0
  %393 = vmatpush1.msra.mxu0 0.0
  %394 = vmatprep.subr.mxu0 0.0
  %395 = vmatpush1.msra.mxu0 0.0
  %396 = vmatprep.subr.mxu0 0.0
  %397 = vmatpush1.msra.mxu0 0.0
  %398 = vmatprep.subr.mxu0 0.0
  %399 = vmatpush1.msra.mxu0 0.0
  %400 = vmatprep.subr.mxu0 0.0
  %401 = vmatpush1.msra.mxu0 0.0
  %402 = vmatprep.subr.mxu0 0.0
  %403 = vmatpush1.msra.mxu0 0.0
  %404 = vmatprep.subr.mxu0 0.0
  %405 = vmatpush1.msra.mxu0 0.0
  %406 = vmatprep.mubr.f32.mxu0 0.0
  %407 = vmatmul.mubr.f32.gmra.mrb[0].mxu0 %v296
  %v408 = vpop.f32.mrb[0].mxu0
  %v409 = vadd.f32 %v335, %v408
  %v410 = vpop.f32.mrb[0].mxu0
  %v411 = vadd.f32 %v339, %v410
  %412 = vdwg.mxu0
  %v413 = vmax.f32 %v409, 0.0
  %v414 = vmax.f32 %v411, 0.0
  %v415 = vld [vmem:[%s6] sm:$0xff]
  %v416 = vld [vmem:[%s6 + $0x8] sm:$0xff]
  %v417 = vld [vmem:[%s6 + $0x10] sm:$0xff]
  %v418 = vld [vmem:[%s6 + $0x18] sm:$0xff]
  %v419 = vld [vmem:[%s6 + $0x20] sm:$0xff]
  %v420 = vld [vmem:[%s6 + $0x28] sm:$0xff]
  %v421 = vld [vmem:[%s6 + $0x30] sm:$0xff]
  %v422 = vld [vmem:[%s6 + $0x38] sm:$0xff]
  %v423 = vld [vmem:[%s6 + $0x40] sm:$0xff]
  %v424 = vld [vmem:[%s6 + $0x48] sm:$0xff]
  %v425 = vld [vmem:[%s6 + $0x50] sm:$0xff]
  %v426 = vld [vmem:[%s6 + $0x58] sm:$0xff]
  %v427 = vld [vmem:[%s6 + $0x60] sm:$0xff]
  %v428 = vld [vmem:[%s6 + $0x68] sm:$0xff]
  %v429 = vld [vmem:[%s6 + $0x70] sm:$0xff]
  %v430 = vld [vmem:[%s6 + $0x78] sm:$0xff]
  %v431 = vld [vmem:[%s6 + $0x80] sm:$0xff]
  %v432 = vld [vmem:[%s6 + $0x88] sm:$0xff]
  %v433 = vld [vmem:[%s6 + $0x90] sm:$0xff]
  %v434 = vld [vmem:[%s6 + $0x98] sm:$0xff]
  %v435 = vld [vmem:[%s6 + $0xa0] sm:$0xff]
  %v436 = vld [vmem:[%s6 + $0xa8] sm:$0xff]
  %v437 = vld [vmem:[%s6 + $0xb0] sm:$0xff]
  %v438 = vld [vmem:[%s6 + $0xb8] sm:$0xff]
  %v439 = vld [vmem:[%s6 + $0xc0] sm:$0xff]
  %v440 = vld [vmem:[%s6 + $0xc8] sm:$0xff]
  %v441 = vld [vmem:[%s6 + $0xd0] sm:$0xff]
  %v442 = vld [vmem:[%s6 + $0xd8] sm:$0xff]
  %v443 = vld [vmem:[%s6 + $0xe0] sm:$0xff]
  %v444 = vld [vmem:[%s6 + $0xe8] sm:$0xff]
  %v445 = vld [vmem:[%s6 + $0xf0] sm:$0xff]
  %v446 = vld [vmem:[%s6 + $0xf8] sm:$0xff]
  %v447 = vld [vmem:[%s6 + $0x100] sm:$0xff]
  %v448 = vld [vmem:[%s6 + $0x108] sm:$0xff]
  %v449 = vld [vmem:[%s6 + $0x110] sm:$0xff]
  %v450 = vld [vmem:[%s6 + $0x118] sm:$0xff]
  %v451 = vld [vmem:[%s6 + $0x120] sm:$0xff]
  %v452 = vld [vmem:[%s6 + $0x128] sm:$0xff]
  %v453 = vld [vmem:[%s6 + $0x130] sm:$0xff]
  %v454 = vld [vmem:[%s6 + $0x138] sm:$0xff]
  %v455 = vld [vmem:[%s6 + $0x140] sm:$0xff]
  %v456 = vld [vmem:[%s6 + $0x148] sm:$0xff]
  %v457 = vld [vmem:[%s6 + $0x150] sm:$0xff]
  %v458 = vld [vmem:[%s6 + $0x158] sm:$0xff]
  %v459 = vld [vmem:[%s6 + $0x160] sm:$0xff]
  %v460 = vld [vmem:[%s6 + $0x168] sm:$0xff]
  %v461 = vld [vmem:[%s6 + $0x170] sm:$0xff]
  %v462 = vld [vmem:[%s6 + $0x178] sm:$0xff]
  %v463 = vld [vmem:[%s6 + $0x180] sm:$0xff]
  %v464 = vld [vmem:[%s6 + $0x188] sm:$0xff]
  %v465 = vld [vmem:[%s6 + $0x190] sm:$0xff]
  %v466 = vld [vmem:[%s6 + $0x198] sm:$0xff]
  %v467 = vld [vmem:[%s6 + $0x1a0] sm:$0xff]
  %v468 = vld [vmem:[%s6 + $0x1a8] sm:$0xff]
  %v469 = vld [vmem:[%s6 + $0x1b0] sm:$0xff]
  %v470 = vld [vmem:[%s6 + $0x1b8] sm:$0xff]
  %v471 = vld [vmem:[%s6 + $0x1c0] sm:$0xff]
  %v472 = vld [vmem:[%s6 + $0x1c8] sm:$0xff]
  %v473 = vld [vmem:[%s6 + $0x1d0] sm:$0xff]
  %v474 = vld [vmem:[%s6 + $0x1d8] sm:$0xff]
  %v475 = vld [vmem:[%s6 + $0x1e0] sm:$0xff]
  %v476 = vld [vmem:[%s6 + $0x1e8] sm:$0xff]
  %v477 = vld [vmem:[%s6 + $0x1f0] sm:$0xff]
  %v478 = vld [vmem:[%s6 + $0x1f8] sm:$0xff]
  %v479 = vld [vmem:[%s6 + $0x200] sm:$0xff]
  %v480 = vld [vmem:[%s6 + $0x208] sm:$0xff]
  %v481 = vld [vmem:[%s6 + $0x210] sm:$0xff]
  %v482 = vld [vmem:[%s6 + $0x218] sm:$0xff]
  %v483 = vld [vmem:[%s6 + $0x220] sm:$0xff]
  %v484 = vld [vmem:[%s6 + $0x228] sm:$0xff]
  %v485 = vld [vmem:[%s6 + $0x230] sm:$0xff]
  %v486 = vld [vmem:[%s6 + $0x238] sm:$0xff]
  %v487 = vld [vmem:[%s6 + $0x240] sm:$0xff]
  %v488 = vld [vmem:[%s6 + $0x248] sm:$0xff]
  %v489 = vld [vmem:[%s6 + $0x250] sm:$0xff]
  %v490 = vld [vmem:[%s6 + $0x258] sm:$0xff]
  %v491 = vld [vmem:[%s6 + $0x260] sm:$0xff]
  %v492 = vld [vmem:[%s6 + $0x268] sm:$0xff]
  %v493 = vld [vmem:[%s6 + $0x270] sm:$0xff]
  %v494 = vld [vmem:[%s6 + $0x278] sm:$0xff]
  %v495 = vld [vmem:[%s6 + $0x280] sm:$0xff]
  %v496 = vld [vmem:[%s6 + $0x288] sm:$0xff]
  %v497 = vld [vmem:[%s6 + $0x290] sm:$0xff]
  %v498 = vld [vmem:[%s6 + $0x298] sm:$0xff]
  %v499 = vld [vmem:[%s6 + $0x2a0] sm:$0xff]
  %v500 = vld [vmem:[%s6 + $0x2a8] sm:$0xff]
  %v501 = vld [vmem:[%s6 + $0x2b0] sm:$0xff]
  %v502 = vld [vmem:[%s6 + $0x2b8] sm:$0xff]
  %v503 = vld [vmem:[%s6 + $0x2c0] sm:$0xff]
  %v504 = vld [vmem:[%s6 + $0x2c8] sm:$0xff]
  %v505 = vld [vmem:[%s6 + $0x2d0] sm:$0xff]
  %v506 = vld [vmem:[%s6 + $0x2d8] sm:$0xff]
  %v507 = vld [vmem:[%s6 + $0x2e0] sm:$0xff]
  %v508 = vld [vmem:[%s6 + $0x2e8] sm:$0xff]
  %v509 = vld [vmem:[%s6 + $0x2f0] sm:$0xff]
  %v510 = vld [vmem:[%s6 + $0x2f8] sm:$0xff]
  %s511 = scalar_lea.vmem %s1, 4
  %v512 = vld [vmem:[%s511] ss:$8 sm:$0x7]
  %v514 = vlaneseq
  %v515 = vshrl.u32 %v514, 7
  %v516 = vsub.s32 0, %v515
  %v517 = vrot.slane %v512, %v516
  %v518 = vlaneseq
  %v519 = vshrl.u32 %v518, 7
  %v520 = vsub.s32 1, %v519
  %v521 = vrot.slane %v512, %v520
  %v522 = vlaneseq
  %v523 = vshrl.u32 %v522, 7
  %v524 = vsub.s32 2, %v523
  %v525 = vrot.slane %v512, %v524
  %529 = vmatprep.subr.mxu0 %v416
  %530 = vmatpush1.msra.mxu0 %v415
  %531 = vmatprep.subr.mxu0 %v419
  %532 = vmatpush1.msra.mxu0 %v418
  %533 = vmatprep.subr.mxu0 %v422
  %534 = vmatpush1.msra.mxu0 %v421
  %535 = vmatprep.subr.mxu0 %v425
  %536 = vmatpush1.msra.mxu0 %v424
  %537 = vmatprep.subr.mxu0 %v428
  %538 = vmatpush1.msra.mxu0 %v427
  %539 = vmatprep.subr.mxu0 %v431
  %540 = vmatpush1.msra.mxu0 %v430
  %541 = vmatprep.subr.mxu0 %v434
  %542 = vmatpush1.msra.mxu0 %v433
  %543 = vmatprep.subr.mxu0 %v437
  %544 = vmatpush1.msra.mxu0 %v436
  %545 = vmatprep.subr.mxu0 %v440
  %546 = vmatpush1.msra.mxu0 %v439
  %547 = vmatprep.subr.mxu0 %v443
  %548 = vmatpush1.msra.mxu0 %v442
  %549 = vmatprep.subr.mxu0 %v446
  %550 = vmatpush1.msra.mxu0 %v445
  %551 = vmatprep.subr.mxu0 %v449
  %552 = vmatpush1.msra.mxu0 %v448
  %553 = vmatprep.subr.mxu0 %v452
  %554 = vmatpush1.msra.mxu0 %v451
  %555 = vmatprep.subr.mxu0 %v455
  %556 = vmatpush1.msra.mxu0 %v454
  %557 = vmatprep.subr.mxu0 %v458
  %558 = vmatpush1.msra.mxu0 %v457
  %559 = vmatprep.subr.mxu0 %v461
  %560 = vmatpush1.msra.mxu0 %v460
  %561 = vmatprep.subr.mxu0 %v464
  %562 = vmatpush1.msra.mxu0 %v463
  %563 = vmatprep.subr.mxu0 %v467
  %564 = vmatpush1.msra.mxu0 %v466
  %565 = vmatprep.subr.mxu0 %v470
  %566 = vmatpush1.msra.mxu0 %v469
  %567 = vmatprep.subr.mxu0 %v473
  %568 = vmatpush1.msra.mxu0 %v472
  %569 = vmatprep.subr.mxu0 %v476
  %570 = vmatpush1.msra.mxu0 %v475
  %571 = vmatprep.subr.mxu0 %v479
  %572 = vmatpush1.msra.mxu0 %v478
  %573 = vmatprep.subr.mxu0 %v482
  %574 = vmatpush1.msra.mxu0 %v481
  %575 = vmatprep.subr.mxu0 %v485
  %576 = vmatpush1.msra.mxu0 %v484
  %577 = vmatprep.subr.mxu0 %v488
  %578 = vmatpush1.msra.mxu0 %v487
  %579 = vmatprep.subr.mxu0 %v491
  %580 = vmatpush1.msra.mxu0 %v490
  %581 = vmatprep.subr.mxu0 %v494
  %582 = vmatpush1.msra.mxu0 %v493
  %583 = vmatprep.subr.mxu0 %v497
  %584 = vmatpush1.msra.mxu0 %v496
  %585 = vmatprep.subr.mxu0 %v500
  %586 = vmatpush1.msra.mxu0 %v499
  %587 = vmatprep.subr.mxu0 %v503
  %588 = vmatpush1.msra.mxu0 %v502
  %589 = vmatprep.subr.mxu0 %v506
  %590 = vmatpush1.msra.mxu0 %v505
  %591 = vmatprep.subr.mxu0 %v509
  %592 = vmatpush1.msra.mxu0 %v508
  %593 = vmatprep.mubr.f32.mxu0 %v414
  %594 = vmatmul.mubr.f32.gmra.mrb[0].mxu0 %v413
  %v595 = vpop.f32.mrb[0].mxu0
  %v596 = vadd.f32 %v517, %v595
  %v597 = vpop.f32.mrb[0].mxu0
  %v598 = vadd.f32 %v521, %v597
  %599 = vdwg.mxu0
  %600 = vmatprep.subr.mxu0 0.0
  %601 = vmatpush1.msra.mxu0 %v417
  %602 = vmatprep.subr.mxu0 0.0
  %603 = vmatpush1.msra.mxu0 %v420
  %604 = vmatprep.subr.mxu0 0.0
  %605 = vmatpush1.msra.mxu0 %v423
  %606 = vmatprep.subr.mxu0 0.0
  %607 = vmatpush1.msra.mxu0 %v426
  %608 = vmatprep.subr.mxu0 0.0
  %609 = vmatpush1.msra.mxu0 %v429
  %610 = vmatprep.subr.mxu0 0.0
  %611 = vmatpush1.msra.mxu0 %v432
  %612 = vmatprep.subr.mxu0 0.0
  %613 = vmatpush1.msra.mxu0 %v435
  %614 = vmatprep.subr.mxu0 0.0
  %615 = vmatpush1.msra.mxu0 %v438
  %616 = vmatprep.subr.mxu0 0.0
  %617 = vmatpush1.msra.mxu0 %v441
  %618 = vmatprep.subr.mxu0 0.0
  %619 = vmatpush1.msra.mxu0 %v444
  %620 = vmatprep.subr.mxu0 0.0
  %621 = vmatpush1.msra.mxu0 %v447
  %622 = vmatprep.subr.mxu0 0.0
  %623 = vmatpush1.msra.mxu0 %v450
  %624 = vmatprep.subr.mxu0 0.0
  %625 = vmatpush1.msra.mxu0 %v453
  %626 = vmatprep.subr.mxu0 0.0
  %627 = vmatpush1.msra.mxu0 %v456
  %628 = vmatprep.subr.mxu0 0.0
  %629 = vmatpush1.msra.mxu0 %v459
  %630 = vmatprep.subr.mxu0 0.0
  %631 = vmatpush1.msra.mxu0 %v462
  %632 = vmatprep.subr.mxu0 0.0
  %633 = vmatpush1.msra.mxu0 %v465
  %634 = vmatprep.subr.mxu0 0.0
  %635 = vmatpush1.msra.mxu0 %v468
  %636 = vmatprep.subr.mxu0 0.0
  %637 = vmatpush1.msra.mxu0 %v471
  %638 = vmatprep.subr.mxu0 0.0
  %639 = vmatpush1.msra.mxu0 %v474
  %640 = vmatprep.subr.mxu0 0.0
  %641 = vmatpush1.msra.mxu0 %v477
  %642 = vmatprep.subr.mxu0 0.0
  %643 = vmatpush1.msra.mxu0 %v480
  %644 = vmatprep.subr.mxu0 0.0
  %645 = vmatpush1.msra.mxu0 %v483
  %646 = vmatprep.subr.mxu0 0.0
  %647 = vmatpush1.msra.mxu0 %v486
  %648 = vmatprep.subr.mxu0 0.0
  %649 = vmatpush1.msra.mxu0 %v489
  %650 = vmatprep.subr.mxu0 0.0
  %651 = vmatpush1.msra.mxu0 %v492
  %652 = vmatprep.subr.mxu0 0.0
  %653 = vmatpush1.msra.mxu0 %v495
  %654 = vmatprep.subr.mxu0 0.0
  %655 = vmatpush1.msra.mxu0 %v498
  %656 = vmatprep.subr.mxu0 0.0
  %657 = vmatpush1.msra.mxu0 %v501
  %658 = vmatprep.subr.mxu0 0.0
  %659 = vmatpush1.msra.mxu0 %v504
  %660 = vmatprep.subr.mxu0 0.0
  %661 = vmatpush1.msra.mxu0 %v507
  %662 = vmatprep.subr.mxu0 0.0
  %663 = vmatpush1.msra.mxu0 %v510
  %664 = vmatprep.mubr.f32.mxu0 %v414
  %665 = vmatmul.mubr.f32.gmra.mrb[0].mxu0 %v413
  %v666 = vpop.f32.mrb[0].mxu0
  %v667 = vadd.f32 %v525, %v666
  %v668 = vpop.f32.mrb[0].mxu0
  %669 = vdwg.mxu0
  %v670 = vmax.f32 %v596, 0.0
  %v671 = vmax.f32 %v598, 0.0
  %v672 = vmax.f32 %v667, 0.0
  %v673 = vld [vmem:[%s7] sm:$0xff]
  %v674 = vld [vmem:[%s7 + $0x8] sm:$0xff]
  %v675 = vld [vmem:[%s7 + $0x10] sm:$0xff]
  %v676 = vld [vmem:[%s7 + $0x18] sm:$0xff]
  %v677 = vld [vmem:[%s7 + $0x20] sm:$0xff]
  %v678 = vld [vmem:[%s7 + $0x28] sm:$0xff]
  %v679 = vld [vmem:[%s7 + $0x30] sm:$0xff]
  %v680 = vld [vmem:[%s7 + $0x38] sm:$0xff]
  %v681 = vld [vmem:[%s7 + $0x40] sm:$0xff]
  %v682 = vld [vmem:[%s7 + $0x48] sm:$0xff]
  %v683 = vld [vmem:[%s7 + $0x50] sm:$0xff]
  %v684 = vld [vmem:[%s7 + $0x58] sm:$0xff]
  %v685 = vld [vmem:[%s7 + $0x60] sm:$0xff]
  %v686 = vld [vmem:[%s7 + $0x68] sm:$0xff]
  %v687 = vld [vmem:[%s7 + $0x70] sm:$0xff]
  %v688 = vld [vmem:[%s7 + $0x78] sm:$0xff]
  %v689 = vld [vmem:[%s7 + $0x80] sm:$0xff]
  %v690 = vld [vmem:[%s7 + $0x88] sm:$0xff]
  %v691 = vld [vmem:[%s7 + $0x90] sm:$0xff]
  %v692 = vld [vmem:[%s7 + $0x98] sm:$0xff]
  %v693 = vld [vmem:[%s7 + $0xa0] sm:$0xff]
  %v694 = vld [vmem:[%s7 + $0xa8] sm:$0xff]
  %v695 = vld [vmem:[%s7 + $0xb0] sm:$0xff]
  %v696 = vld [vmem:[%s7 + $0xb8] sm:$0xff]
  %v697 = vld [vmem:[%s7 + $0xc0] sm:$0xff]
  %v698 = vld [vmem:[%s7 + $0xc8] sm:$0xff]
  %v699 = vld [vmem:[%s7 + $0xd0] sm:$0xff]
  %v700 = vld [vmem:[%s7 + $0xd8] sm:$0xff]
  %v701 = vld [vmem:[%s7 + $0xe0] sm:$0xff]
  %v702 = vld [vmem:[%s7 + $0xe8] sm:$0xff]
  %v703 = vld [vmem:[%s7 + $0xf0] sm:$0xff]
  %v704 = vld [vmem:[%s7 + $0xf8] sm:$0xff]
  %v705 = vld [vmem:[%s7 + $0x100] sm:$0xff]
  %v706 = vld [vmem:[%s7 + $0x108] sm:$0xff]
  %v707 = vld [vmem:[%s7 + $0x110] sm:$0xff]
  %v708 = vld [vmem:[%s7 + $0x118] sm:$0xff]
  %v709 = vld [vmem:[%s7 + $0x120] sm:$0xff]
  %v710 = vld [vmem:[%s7 + $0x128] sm:$0xff]
  %v711 = vld [vmem:[%s7 + $0x130] sm:$0xff]
  %v712 = vld [vmem:[%s7 + $0x138] sm:$0xff]
  %v713 = vld [vmem:[%s7 + $0x140] sm:$0xff]
  %v714 = vld [vmem:[%s7 + $0x148] sm:$0xff]
  %v715 = vld [vmem:[%s7 + $0x150] sm:$0xff]
  %v716 = vld [vmem:[%s7 + $0x158] sm:$0xff]
  %v717 = vld [vmem:[%s7 + $0x160] sm:$0xff]
  %v718 = vld [vmem:[%s7 + $0x168] sm:$0xff]
  %v719 = vld [vmem:[%s7 + $0x170] sm:$0xff]
  %v720 = vld [vmem:[%s7 + $0x178] sm:$0xff]
  %v721 = vld [vmem:[%s7 + $0x180] sm:$0xff]
  %v722 = vld [vmem:[%s7 + $0x188] sm:$0xff]
  %v723 = vld [vmem:[%s7 + $0x190] sm:$0xff]
  %v724 = vld [vmem:[%s7 + $0x198] sm:$0xff]
  %v725 = vld [vmem:[%s7 + $0x1a0] sm:$0xff]
  %v726 = vld [vmem:[%s7 + $0x1a8] sm:$0xff]
  %v727 = vld [vmem:[%s7 + $0x1b0] sm:$0xff]
  %v728 = vld [vmem:[%s7 + $0x1b8] sm:$0xff]
  %v729 = vld [vmem:[%s7 + $0x1c0] sm:$0xff]
  %v730 = vld [vmem:[%s7 + $0x1c8] sm:$0xff]
  %v731 = vld [vmem:[%s7 + $0x1d0] sm:$0xff]
  %v732 = vld [vmem:[%s7 + $0x1d8] sm:$0xff]
  %v733 = vld [vmem:[%s7 + $0x1e0] sm:$0xff]
  %v734 = vld [vmem:[%s7 + $0x1e8] sm:$0xff]
  %v735 = vld [vmem:[%s7 + $0x1f0] sm:$0xff]
  %v736 = vld [vmem:[%s7 + $0x1f8] sm:$0xff]
  %v737 = vld [vmem:[%s7 + $0x200] sm:$0xff]
  %v738 = vld [vmem:[%s7 + $0x208] sm:$0xff]
  %v739 = vld [vmem:[%s7 + $0x210] sm:$0xff]
  %v740 = vld [vmem:[%s7 + $0x218] sm:$0xff]
  %v741 = vld [vmem:[%s7 + $0x220] sm:$0xff]
  %v742 = vld [vmem:[%s7 + $0x228] sm:$0xff]
  %v743 = vld [vmem:[%s7 + $0x230] sm:$0xff]
  %v744 = vld [vmem:[%s7 + $0x238] sm:$0xff]
  %v745 = vld [vmem:[%s7 + $0x240] sm:$0xff]
  %v746 = vld [vmem:[%s7 + $0x248] sm:$0xff]
  %v747 = vld [vmem:[%s7 + $0x250] sm:$0xff]
  %v748 = vld [vmem:[%s7 + $0x258] sm:$0xff]
  %v749 = vld [vmem:[%s7 + $0x260] sm:$0xff]
  %v750 = vld [vmem:[%s7 + $0x268] sm:$0xff]
  %v751 = vld [vmem:[%s7 + $0x270] sm:$0xff]
  %v752 = vld [vmem:[%s7 + $0x278] sm:$0xff]
  %v753 = vld [vmem:[%s7 + $0x280] sm:$0xff]
  %v754 = vld [vmem:[%s7 + $0x288] sm:$0xff]
  %v755 = vld [vmem:[%s7 + $0x290] sm:$0xff]
  %v756 = vld [vmem:[%s7 + $0x298] sm:$0xff]
  %v757 = vld [vmem:[%s7 + $0x2a0] sm:$0xff]
  %v758 = vld [vmem:[%s7 + $0x2a8] sm:$0xff]
  %v759 = vld [vmem:[%s7 + $0x2b0] sm:$0xff]
  %v760 = vld [vmem:[%s7 + $0x2b8] sm:$0xff]
  %v761 = vld [vmem:[%s7 + $0x2c0] sm:$0xff]
  %v762 = vld [vmem:[%s7 + $0x2c8] sm:$0xff]
  %v763 = vld [vmem:[%s7 + $0x2d0] sm:$0xff]
  %v764 = vld [vmem:[%s7 + $0x2d8] sm:$0xff]
  %v765 = vld [vmem:[%s7 + $0x2e0] sm:$0xff]
  %v766 = vld [vmem:[%s7 + $0x2e8] sm:$0xff]
  %v767 = vld [vmem:[%s7 + $0x2f0] sm:$0xff]
  %v768 = vld [vmem:[%s7 + $0x2f8] sm:$0xff]
  %v769 = vld [vmem:[%s7 + $0x300] sm:$0xff]
  %v770 = vld [vmem:[%s7 + $0x308] sm:$0xff]
  %v771 = vld [vmem:[%s7 + $0x310] sm:$0xff]
  %v772 = vld [vmem:[%s7 + $0x318] sm:$0xff]
  %v773 = vld [vmem:[%s7 + $0x320] sm:$0xff]
  %v774 = vld [vmem:[%s7 + $0x328] sm:$0xff]
  %v775 = vld [vmem:[%s7 + $0x330] sm:$0xff]
  %v776 = vld [vmem:[%s7 + $0x338] sm:$0xff]
  %v777 = vld [vmem:[%s7 + $0x340] sm:$0xff]
  %v778 = vld [vmem:[%s7 + $0x348] sm:$0xff]
  %v779 = vld [vmem:[%s7 + $0x350] sm:$0xff]
  %v780 = vld [vmem:[%s7 + $0x358] sm:$0xff]
  %v781 = vld [vmem:[%s7 + $0x360] sm:$0xff]
  %v782 = vld [vmem:[%s7 + $0x368] sm:$0xff]
  %v783 = vld [vmem:[%s7 + $0x370] sm:$0xff]
  %v784 = vld [vmem:[%s7 + $0x378] sm:$0xff]
  %v785 = vld [vmem:[%s7 + $0x380] sm:$0xff]
  %v786 = vld [vmem:[%s7 + $0x388] sm:$0xff]
  %v787 = vld [vmem:[%s7 + $0x390] sm:$0xff]
  %v788 = vld [vmem:[%s7 + $0x398] sm:$0xff]
  %v789 = vld [vmem:[%s7 + $0x3a0] sm:$0xff]
  %v790 = vld [vmem:[%s7 + $0x3a8] sm:$0xff]
  %v791 = vld [vmem:[%s7 + $0x3b0] sm:$0xff]
  %v792 = vld [vmem:[%s7 + $0x3b8] sm:$0xff]
  %v793 = vld [vmem:[%s7 + $0x3c0] sm:$0xff]
  %v794 = vld [vmem:[%s7 + $0x3c8] sm:$0xff]
  %v795 = vld [vmem:[%s7 + $0x3d0] sm:$0xff]
  %v796 = vld [vmem:[%s7 + $0x3d8] sm:$0xff]
  %v797 = vld [vmem:[%s7 + $0x3e0] sm:$0xff]
  %v798 = vld [vmem:[%s7 + $0x3e8] sm:$0xff]
  %v799 = vld [vmem:[%s7 + $0x3f0] sm:$0xff]
  %v800 = vld [vmem:[%s7 + $0x3f8] sm:$0xff]
  %v801 = vld [vmem:[%s7 + $0x400] sm:$0xff]
  %v802 = vld [vmem:[%s7 + $0x408] sm:$0xff]
  %v803 = vld [vmem:[%s7 + $0x410] sm:$0xff]
  %v804 = vld [vmem:[%s7 + $0x418] sm:$0xff]
  %v805 = vld [vmem:[%s7 + $0x420] sm:$0xff]
  %v806 = vld [vmem:[%s7 + $0x428] sm:$0xff]
  %v807 = vld [vmem:[%s7 + $0x430] sm:$0xff]
  %v808 = vld [vmem:[%s7 + $0x438] sm:$0xff]
  %v809 = vld [vmem:[%s7 + $0x440] sm:$0xff]
  %v810 = vld [vmem:[%s7 + $0x448] sm:$0xff]
  %v811 = vld [vmem:[%s7 + $0x450] sm:$0xff]
  %v812 = vld [vmem:[%s7 + $0x458] sm:$0xff]
  %v813 = vld [vmem:[%s7 + $0x460] sm:$0xff]
  %v814 = vld [vmem:[%s7 + $0x468] sm:$0xff]
  %v815 = vld [vmem:[%s7 + $0x470] sm:$0xff]
  %v816 = vld [vmem:[%s7 + $0x478] sm:$0xff]
  %v817 = vld [vmem:[%s7 + $0x480] sm:$0xff]
  %v818 = vld [vmem:[%s7 + $0x488] sm:$0xff]
  %v819 = vld [vmem:[%s7 + $0x490] sm:$0xff]
  %v820 = vld [vmem:[%s7 + $0x498] sm:$0xff]
  %v821 = vld [vmem:[%s7 + $0x4a0] sm:$0xff]
  %v822 = vld [vmem:[%s7 + $0x4a8] sm:$0xff]
  %v823 = vld [vmem:[%s7 + $0x4b0] sm:$0xff]
  %v824 = vld [vmem:[%s7 + $0x4b8] sm:$0xff]
  %v825 = vld [vmem:[%s7 + $0x4c0] sm:$0xff]
  %v826 = vld [vmem:[%s7 + $0x4c8] sm:$0xff]
  %v827 = vld [vmem:[%s7 + $0x4d0] sm:$0xff]
  %v828 = vld [vmem:[%s7 + $0x4d8] sm:$0xff]
  %v829 = vld [vmem:[%s7 + $0x4e0] sm:$0xff]
  %v830 = vld [vmem:[%s7 + $0x4e8] sm:$0xff]
  %v831 = vld [vmem:[%s7 + $0x4f0] sm:$0xff]
  %v832 = vld [vmem:[%s7 + $0x4f8] sm:$0xff]
  %v833 = vld [vmem:[%s7 + $0x500] sm:$0xff]
  %v834 = vld [vmem:[%s7 + $0x508] sm:$0xff]
  %v835 = vld [vmem:[%s7 + $0x510] sm:$0xff]
  %v836 = vld [vmem:[%s7 + $0x518] sm:$0xff]
  %v837 = vld [vmem:[%s7 + $0x520] sm:$0xff]
  %v838 = vld [vmem:[%s7 + $0x528] sm:$0xff]
  %v839 = vld [vmem:[%s7 + $0x530] sm:$0xff]
  %v840 = vld [vmem:[%s7 + $0x538] sm:$0xff]
  %v841 = vld [vmem:[%s7 + $0x540] sm:$0xff]
  %v842 = vld [vmem:[%s7 + $0x548] sm:$0xff]
  %v843 = vld [vmem:[%s7 + $0x550] sm:$0xff]
  %v844 = vld [vmem:[%s7 + $0x558] sm:$0xff]
  %v845 = vld [vmem:[%s7 + $0x560] sm:$0xff]
  %v846 = vld [vmem:[%s7 + $0x568] sm:$0xff]
  %v847 = vld [vmem:[%s7 + $0x570] sm:$0xff]
  %v848 = vld [vmem:[%s7 + $0x578] sm:$0xff]
  %v849 = vld [vmem:[%s7 + $0x580] sm:$0xff]
  %v850 = vld [vmem:[%s7 + $0x588] sm:$0xff]
  %v851 = vld [vmem:[%s7 + $0x590] sm:$0xff]
  %v852 = vld [vmem:[%s7 + $0x598] sm:$0xff]
  %v853 = vld [vmem:[%s7 + $0x5a0] sm:$0xff]
  %v854 = vld [vmem:[%s7 + $0x5a8] sm:$0xff]
  %v855 = vld [vmem:[%s7 + $0x5b0] sm:$0xff]
  %v856 = vld [vmem:[%s7 + $0x5b8] sm:$0xff]
  %v857 = vld [vmem:[%s7 + $0x5c0] sm:$0xff]
  %v858 = vld [vmem:[%s7 + $0x5c8] sm:$0xff]
  %v859 = vld [vmem:[%s7 + $0x5d0] sm:$0xff]
  %v860 = vld [vmem:[%s7 + $0x5d8] sm:$0xff]
  %v861 = vld [vmem:[%s7 + $0x5e0] sm:$0xff]
  %v862 = vld [vmem:[%s7 + $0x5e8] sm:$0xff]
  %v863 = vld [vmem:[%s7 + $0x5f0] sm:$0xff]
  %v864 = vld [vmem:[%s7 + $0x5f8] sm:$0xff]
  %v865 = vld [vmem:[%s7 + $0x600] sm:$0xff]
  %v866 = vld [vmem:[%s7 + $0x608] sm:$0xff]
  %v867 = vld [vmem:[%s7 + $0x610] sm:$0xff]
  %v868 = vld [vmem:[%s7 + $0x618] sm:$0xff]
  %v869 = vld [vmem:[%s7 + $0x620] sm:$0xff]
  %v870 = vld [vmem:[%s7 + $0x628] sm:$0xff]
  %v871 = vld [vmem:[%s7 + $0x630] sm:$0xff]
  %v872 = vld [vmem:[%s7 + $0x638] sm:$0xff]
  %v873 = vld [vmem:[%s7 + $0x640] sm:$0xff]
  %v874 = vld [vmem:[%s7 + $0x648] sm:$0xff]
  %v875 = vld [vmem:[%s7 + $0x650] sm:$0xff]
  %v876 = vld [vmem:[%s7 + $0x658] sm:$0xff]
  %v877 = vld [vmem:[%s7 + $0x660] sm:$0xff]
  %v878 = vld [vmem:[%s7 + $0x668] sm:$0xff]
  %v879 = vld [vmem:[%s7 + $0x670] sm:$0xff]
  %v880 = vld [vmem:[%s7 + $0x678] sm:$0xff]
  %v881 = vld [vmem:[%s7 + $0x680] sm:$0xff]
  %v882 = vld [vmem:[%s7 + $0x688] sm:$0xff]
  %v883 = vld [vmem:[%s7 + $0x690] sm:$0xff]
  %v884 = vld [vmem:[%s7 + $0x698] sm:$0xff]
  %v885 = vld [vmem:[%s7 + $0x6a0] sm:$0xff]
  %v886 = vld [vmem:[%s7 + $0x6a8] sm:$0xff]
  %v887 = vld [vmem:[%s7 + $0x6b0] sm:$0xff]
  %v888 = vld [vmem:[%s7 + $0x6b8] sm:$0xff]
  %v889 = vld [vmem:[%s7 + $0x6c0] sm:$0xff]
  %v890 = vld [vmem:[%s7 + $0x6c8] sm:$0xff]
  %v891 = vld [vmem:[%s7 + $0x6d0] sm:$0xff]
  %v892 = vld [vmem:[%s7 + $0x6d8] sm:$0xff]
  %v893 = vld [vmem:[%s7 + $0x6e0] sm:$0xff]
  %v894 = vld [vmem:[%s7 + $0x6e8] sm:$0xff]
  %v895 = vld [vmem:[%s7 + $0x6f0] sm:$0xff]
  %v896 = vld [vmem:[%s7 + $0x6f8] sm:$0xff]
  %v897 = vld [vmem:[%s7 + $0x700] sm:$0xff]
  %v898 = vld [vmem:[%s7 + $0x708] sm:$0xff]
  %v899 = vld [vmem:[%s7 + $0x710] sm:$0xff]
  %v900 = vld [vmem:[%s7 + $0x718] sm:$0xff]
  %v901 = vld [vmem:[%s7 + $0x720] sm:$0xff]
  %v902 = vld [vmem:[%s7 + $0x728] sm:$0xff]
  %v903 = vld [vmem:[%s7 + $0x730] sm:$0xff]
  %v904 = vld [vmem:[%s7 + $0x738] sm:$0xff]
  %v905 = vld [vmem:[%s7 + $0x740] sm:$0xff]
  %v906 = vld [vmem:[%s7 + $0x748] sm:$0xff]
  %v907 = vld [vmem:[%s7 + $0x750] sm:$0xff]
  %v908 = vld [vmem:[%s7 + $0x758] sm:$0xff]
  %v909 = vld [vmem:[%s7 + $0x760] sm:$0xff]
  %v910 = vld [vmem:[%s7 + $0x768] sm:$0xff]
  %v911 = vld [vmem:[%s7 + $0x770] sm:$0xff]
  %v912 = vld [vmem:[%s7 + $0x778] sm:$0xff]
  %s913 = scalar_lea.vmem %s1, 5
  %v914 = vld [vmem:[%s913] ss:$8 sm:$0xf]
  %v915 = vld [vmem:[%s913] ss:$8 sm:$0x10]
  %v916 = vor.u32 %v914, %v915
  %v918 = vlaneseq
  %v919 = vshrl.u32 %v918, 7
  %v920 = vsub.s32 0, %v919
  %v921 = vrot.slane %v916, %v920
  %v922 = vlaneseq
  %v923 = vshrl.u32 %v922, 7
  %v924 = vsub.s32 1, %v923
  %v925 = vrot.slane %v916, %v924
  %v926 = vlaneseq
  %v927 = vshrl.u32 %v926, 7
  %v928 = vsub.s32 2, %v927
  %v929 = vrot.slane %v916, %v928
  %v930 = vlaneseq
  %v931 = vshrl.u32 %v930, 7
  %v932 = vsub.s32 3, %v931
  %v933 = vrot.slane %v916, %v932
  %v934 = vlaneseq
  %v935 = vshrl.u32 %v934, 7
  %v936 = vsub.s32 4, %v935
  %v937 = vrot.slane %v916, %v936
  %943 = vmatprep.subr.mxu0 %v674
  %944 = vmatpush1.msra.mxu0 %v673
  %945 = vmatprep.subr.mxu0 %v679
  %946 = vmatpush1.msra.mxu0 %v678
  %947 = vmatprep.subr.mxu0 %v684
  %948 = vmatpush1.msra.mxu0 %v683
  %949 = vmatprep.subr.mxu0 %v689
  %950 = vmatpush1.msra.mxu0 %v688
  %951 = vmatprep.subr.mxu0 %v694
  %952 = vmatpush1.msra.mxu0 %v693
  %953 = vmatprep.subr.mxu0 %v699
  %954 = vmatpush1.msra.mxu0 %v698
  %955 = vmatprep.subr.mxu0 %v704
  %956 = vmatpush1.msra.mxu0 %v703
  %957 = vmatprep.subr.mxu0 %v709
  %958 = vmatpush1.msra.mxu0 %v708
  %959 = vmatprep.subr.mxu0 %v714
  %960 = vmatpush1.msra.mxu0 %v713
  %961 = vmatprep.subr.mxu0 %v719
  %962 = vmatpush1.msra.mxu0 %v718
  %963 = vmatprep.subr.mxu0 %v724
  %964 = vmatpush1.msra.mxu0 %v723
  %965 = vmatprep.subr.mxu0 %v729
  %966 = vmatpush1.msra.mxu0 %v728
  %967 = vmatprep.subr.mxu0 %v734
  %968 = vmatpush1.msra.mxu0 %v733
  %969 = vmatprep.subr.mxu0 %v739
  %970 = vmatpush1.msra.mxu0 %v738
  %971 = vmatprep.subr.mxu0 %v744
  %972 = vmatpush1.msra.mxu0 %v743
  %973 = vmatprep.subr.mxu0 %v749
  %974 = vmatpush1.msra.mxu0 %v748
  %975 = vmatprep.subr.mxu0 %v754
  %976 = vmatpush1.msra.mxu0 %v753
  %977 = vmatprep.subr.mxu0 %v759
  %978 = vmatpush1.msra.mxu0 %v758
  %979 = vmatprep.subr.mxu0 %v764
  %980 = vmatpush1.msra.mxu0 %v763
  %981 = vmatprep.subr.mxu0 %v769
  %982 = vmatpush1.msra.mxu0 %v768
  %983 = vmatprep.subr.mxu0 %v774
  %984 = vmatpush1.msra.mxu0 %v773
  %985 = vmatprep.subr.mxu0 %v779
  %986 = vmatpush1.msra.mxu0 %v778
  %987 = vmatprep.subr.mxu0 %v784
  %988 = vmatpush1.msra.mxu0 %v783
  %989 = vmatprep.subr.mxu0 %v789
  %990 = vmatpush1.msra.mxu0 %v788
  %991 = vmatprep.subr.mxu0 %v794
  %992 = vmatpush1.msra.mxu0 %v793
  %993 = vmatprep.subr.mxu0 %v799
  %994 = vmatpush1.msra.mxu0 %v798
  %995 = vmatprep.subr.mxu0 %v804
  %996 = vmatpush1.msra.mxu0 %v803
  %997 = vmatprep.subr.mxu0 %v809
  %998 = vmatpush1.msra.mxu0 %v808
  %999 = vmatprep.subr.mxu0 %v814
  %1000 = vmatpush1.msra.mxu0 %v813
  %1001 = vmatprep.subr.mxu0 %v819
  %1002 = vmatpush1.msra.mxu0 %v818
  %1003 = vmatprep.subr.mxu0 %v824
  %1004 = vmatpush1.msra.mxu0 %v823
  %1005 = vmatprep.subr.mxu0 %v829
  %1006 = vmatpush1.msra.mxu0 %v828
  %1007 = vmatprep.mubr.f32.mxu0 %v671
  %1008 = vmatmul.mubr.f32.gmra.mrb[0].mxu0 %v670
  %v1009 = vpop.f32.mrb[0].mxu0
  %v1010 = vadd.f32 %v921, %v1009
  %v1011 = vpop.f32.mrb[0].mxu0
  %v1012 = vadd.f32 %v925, %v1011
  %1013 = vdwg.mxu0
  %1014 = vmatprep.subr.mxu0 %v834
  %1015 = vmatpush1.msra.mxu0 %v833
  %1016 = vmatprep.subr.mxu0 %v839
  %1017 = vmatpush1.msra.mxu0 %v838
  %1018 = vmatprep.subr.mxu0 %v844
  %1019 = vmatpush1.msra.mxu0 %v843
  %1020 = vmatprep.subr.mxu0 %v849
  %1021 = vmatpush1.msra.mxu0 %v848
  %1022 = vmatprep.subr.mxu0 %v854
  %1023 = vmatpush1.msra.mxu0 %v853
  %1024 = vmatprep.subr.mxu0 %v859
  %1025 = vmatpush1.msra.mxu0 %v858
  %1026 = vmatprep.subr.mxu0 %v864
  %1027 = vmatpush1.msra.mxu0 %v863
  %1028 = vmatprep.subr.mxu0 %v869
  %1029 = vmatpush1.msra.mxu0 %v868
  %1030 = vmatprep.subr.mxu0 %v874
  %1031 = vmatpush1.msra.mxu0 %v873
  %1032 = vmatprep.subr.mxu0 %v879
  %1033 = vmatpush1.msra.mxu0 %v878
  %1034 = vmatprep.subr.mxu0 %v884
  %1035 = vmatpush1.msra.mxu0 %v883
  %1036 = vmatprep.subr.mxu0 %v889
  %1037 = vmatpush1.msra.mxu0 %v888
  %1038 = vmatprep.subr.mxu0 %v894
  %1039 = vmatpush1.msra.mxu0 %v893
  %1040 = vmatprep.subr.mxu0 %v899
  %1041 = vmatpush1.msra.mxu0 %v898
  %1042 = vmatprep.subr.mxu0 %v904
  %1043 = vmatpush1.msra.mxu0 %v903
  %1044 = vmatprep.subr.mxu0 %v909
  %1045 = vmatpush1.msra.mxu0 %v908
  %1046 = vmatprep.subr.mxu0 0.0
  %1047 = vmatpush1.msra.mxu0 0.0
  %1048 = vmatprep.subr.mxu0 0.0
  %1049 = vmatpush1.msra.mxu0 0.0
  %1050 = vmatprep.subr.mxu0 0.0
  %1051 = vmatpush1.msra.mxu0 0.0
  %1052 = vmatprep.subr.mxu0 0.0
  %1053 = vmatpush1.msra.mxu0 0.0
  %1054 = vmatprep.subr.mxu0 0.0
  %1055 = vmatpush1.msra.mxu0 0.0
  %1056 = vmatprep.subr.mxu0 0.0
  %1057 = vmatpush1.msra.mxu0 0.0
  %1058 = vmatprep.subr.mxu0 0.0
  %1059 = vmatpush1.msra.mxu0 0.0
  %1060 = vmatprep.subr.mxu0 0.0
  %1061 = vmatpush1.msra.mxu0 0.0
  %1062 = vmatprep.subr.mxu0 0.0
  %1063 = vmatpush1.msra.mxu0 0.0
  %1064 = vmatprep.subr.mxu0 0.0
  %1065 = vmatpush1.msra.mxu0 0.0
  %1066 = vmatprep.subr.mxu0 0.0
  %1067 = vmatpush1.msra.mxu0 0.0
  %1068 = vmatprep.subr.mxu0 0.0
  %1069 = vmatpush1.msra.mxu0 0.0
  %1070 = vmatprep.subr.mxu0 0.0
  %1071 = vmatpush1.msra.mxu0 0.0
  %1072 = vmatprep.subr.mxu0 0.0
  %1073 = vmatpush1.msra.mxu0 0.0
  %1074 = vmatprep.subr.mxu0 0.0
  %1075 = vmatpush1.msra.mxu0 0.0
  %1076 = vmatprep.subr.mxu0 0.0
  %1077 = vmatpush1.msra.mxu0 0.0
  %1078 = vmatprep.mubr.f32.mxu0 0.0
  %1079 = vmatmul.mubr.f32.gmra.mrb[0].mxu0 %v672
  %v1080 = vpop.f32.mrb[0].mxu0
  %v1081 = vadd.f32 %v1010, %v1080
  %v1082 = vpop.f32.mrb[0].mxu0
  %v1083 = vadd.f32 %v1012, %v1082
  %1084 = vdwg.mxu0
  %1085 = vmatprep.subr.mxu0 %v676
  %1086 = vmatpush1.msra.mxu0 %v675
  %1087 = vmatprep.subr.mxu0 %v681
  %1088 = vmatpush1.msra.mxu0 %v680
  %1089 = vmatprep.subr.mxu0 %v686
  %1090 = vmatpush1.msra.mxu0 %v685
  %1091 = vmatprep.subr.mxu0 %v691
  %1092 = vmatpush1.msra.mxu0 %v690
  %1093 = vmatprep.subr.mxu0 %v696
  %1094 = vmatpush1.msra.mxu0 %v695
  %1095 = vmatprep.subr.mxu0 %v701
  %1096 = vmatpush1.msra.mxu0 %v700
  %1097 = vmatprep.subr.mxu0 %v706
  %1098 = vmatpush1.msra.mxu0 %v705
  %1099 = vmatprep.subr.mxu0 %v711
  %1100 = vmatpush1.msra.mxu0 %v710
  %1101 = vmatprep.subr.mxu0 %v716
  %1102 = vmatpush1.msra.mxu0 %v715
  %1103 = vmatprep.subr.mxu0 %v721
  %1104 = vmatpush1.msra.mxu0 %v720
  %1105 = vmatprep.subr.mxu0 %v726
  %1106 = vmatpush1.msra.mxu0 %v725
  %1107 = vmatprep.subr.mxu0 %v731
  %1108 = vmatpush1.msra.mxu0 %v730
  %1109 = vmatprep.subr.mxu0 %v736
  %1110 = vmatpush1.msra.mxu0 %v735
  %1111 = vmatprep.subr.mxu0 %v741
  %1112 = vmatpush1.msra.mxu0 %v740
  %1113 = vmatprep.subr.mxu0 %v746
  %1114 = vmatpush1.msra.mxu0 %v745
  %1115 = vmatprep.subr.mxu0 %v751
  %1116 = vmatpush1.msra.mxu0 %v750
  %1117 = vmatprep.subr.mxu0 %v756
  %1118 = vmatpush1.msra.mxu0 %v755
  %1119 = vmatprep.subr.mxu0 %v761
  %1120 = vmatpush1.msra.mxu0 %v760
  %1121 = vmatprep.subr.mxu0 %v766
  %1122 = vmatpush1.msra.mxu0 %v765
  %1123 = vmatprep.subr.mxu0 %v771
  %1124 = vmatpush1.msra.mxu0 %v770
  %1125 = vmatprep.subr.mxu0 %v776
  %1126 = vmatpush1.msra.mxu0 %v775
  %1127 = vmatprep.subr.mxu0 %v781
  %1128 = vmatpush1.msra.mxu0 %v780
  %1129 = vmatprep.subr.mxu0 %v786
  %1130 = vmatpush1.msra.mxu0 %v785
  %1131 = vmatprep.subr.mxu0 %v791
  %1132 = vmatpush1.msra.mxu0 %v790
  %1133 = vmatprep.subr.mxu0 %v796
  %1134 = vmatpush1.msra.mxu0 %v795
  %1135 = vmatprep.subr.mxu0 %v801
  %1136 = vmatpush1.msra.mxu0 %v800
  %1137 = vmatprep.subr.mxu0 %v806
  %1138 = vmatpush1.msra.mxu0 %v805
  %1139 = vmatprep.subr.mxu0 %v811
  %1140 = vmatpush1.msra.mxu0 %v810
  %1141 = vmatprep.subr.mxu0 %v816
  %1142 = vmatpush1.msra.mxu0 %v815
  %1143 = vmatprep.subr.mxu0 %v821
  %1144 = vmatpush1.msra.mxu0 %v820
  %1145 = vmatprep.subr.mxu0 %v826
  %1146 = vmatpush1.msra.mxu0 %v825
  %1147 = vmatprep.subr.mxu0 %v831
  %1148 = vmatpush1.msra.mxu0 %v830
  %1149 = vmatprep.mubr.f32.mxu0 %v671
  %1150 = vmatmul.mubr.f32.gmra.mrb[0].mxu0 %v670
  %v1151 = vpop.f32.mrb[0].mxu0
  %v1152 = vadd.f32 %v929, %v1151
  %v1153 = vpop.f32.mrb[0].mxu0
  %v1154 = vadd.f32 %v933, %v1153
  %1155 = vdwg.mxu0
  %1156 = vmatprep.subr.mxu0 %v836
  %1157 = vmatpush1.msra.mxu0 %v835
  %1158 = vmatprep.subr.mxu0 %v841
  %1159 = vmatpush1.msra.mxu0 %v840
  %1160 = vmatprep.subr.mxu0 %v846
  %1161 = vmatpush1.msra.mxu0 %v845
  %1162 = vmatprep.subr.mxu0 %v851
  %1163 = vmatpush1.msra.mxu0 %v850
  %1164 = vmatprep.subr.mxu0 %v856
  %1165 = vmatpush1.msra.mxu0 %v855
  %1166 = vmatprep.subr.mxu0 %v861
  %1167 = vmatpush1.msra.mxu0 %v860
  %1168 = vmatprep.subr.mxu0 %v866
  %1169 = vmatpush1.msra.mxu0 %v865
  %1170 = vmatprep.subr.mxu0 %v871
  %1171 = vmatpush1.msra.mxu0 %v870
  %1172 = vmatprep.subr.mxu0 %v876
  %1173 = vmatpush1.msra.mxu0 %v875
  %1174 = vmatprep.subr.mxu0 %v881
  %1175 = vmatpush1.msra.mxu0 %v880
  %1176 = vmatprep.subr.mxu0 %v886
  %1177 = vmatpush1.msra.mxu0 %v885
  %1178 = vmatprep.subr.mxu0 %v891
  %1179 = vmatpush1.msra.mxu0 %v890
  %1180 = vmatprep.subr.mxu0 %v896
  %1181 = vmatpush1.msra.mxu0 %v895
  %1182 = vmatprep.subr.mxu0 %v901
  %1183 = vmatpush1.msra.mxu0 %v900
  %1184 = vmatprep.subr.mxu0 %v906
  %1185 = vmatpush1.msra.mxu0 %v905
  %1186 = vmatprep.subr.mxu0 %v911
  %1187 = vmatpush1.msra.mxu0 %v910
  %1188 = vmatprep.subr.mxu0 0.0
  %1189 = vmatpush1.msra.mxu0 0.0
  %1190 = vmatprep.subr.mxu0 0.0
  %1191 = vmatpush1.msra.mxu0 0.0
  %1192 = vmatprep.subr.mxu0 0.0
  %1193 = vmatpush1.msra.mxu0 0.0
  %1194 = vmatprep.subr.mxu0 0.0
  %1195 = vmatpush1.msra.mxu0 0.0
  %1196 = vmatprep.subr.mxu0 0.0
  %1197 = vmatpush1.msra.mxu0 0.0
  %1198 = vmatprep.subr.mxu0 0.0
  %1199 = vmatpush1.msra.mxu0 0.0
  %1200 = vmatprep.subr.mxu0 0.0
  %1201 = vmatpush1.msra.mxu0 0.0
  %1202 = vmatprep.subr.mxu0 0.0
  %1203 = vmatpush1.msra.mxu0 0.0
  %1204 = vmatprep.subr.mxu0 0.0
  %1205 = vmatpush1.msra.mxu0 0.0
  %1206 = vmatprep.subr.mxu0 0.0
  %1207 = vmatpush1.msra.mxu0 0.0
  %1208 = vmatprep.subr.mxu0 0.0
  %1209 = vmatpush1.msra.mxu0 0.0
  %1210 = vmatprep.subr.mxu0 0.0
  %1211 = vmatpush1.msra.mxu0 0.0
  %1212 = vmatprep.subr.mxu0 0.0
  %1213 = vmatpush1.msra.mxu0 0.0
  %1214 = vmatprep.subr.mxu0 0.0
  %1215 = vmatpush1.msra.mxu0 0.0
  %1216 = vmatprep.subr.mxu0 0.0
  %1217 = vmatpush1.msra.mxu0 0.0
  %1218 = vmatprep.subr.mxu0 0.0
  %1219 = vmatpush1.msra.mxu0 0.0
  %1220 = vmatprep.mubr.f32.mxu0 0.0
  %1221 = vmatmul.mubr.f32.gmra.mrb[0].mxu0 %v672
  %v1222 = vpop.f32.mrb[0].mxu0
  %v1223 = vadd.f32 %v1152, %v1222
  %v1224 = vpop.f32.mrb[0].mxu0
  %v1225 = vadd.f32 %v1154, %v1224
  %1226 = vdwg.mxu0
  %1227 = vmatprep.subr.mxu0 0.0
  %1228 = vmatpush1.msra.mxu0 %v677
  %1229 = vmatprep.subr.mxu0 0.0
  %1230 = vmatpush1.msra.mxu0 %v682
  %1231 = vmatprep.subr.mxu0 0.0
  %1232 = vmatpush1.msra.mxu0 %v687
  %1233 = vmatprep.subr.mxu0 0.0
  %1234 = vmatpush1.msra.mxu0 %v692
  %1235 = vmatprep.subr.mxu0 0.0
  %1236 = vmatpush1.msra.mxu0 %v697
  %1237 = vmatprep.subr.mxu0 0.0
  %1238 = vmatpush1.msra.mxu0 %v702
  %1239 = vmatprep.subr.mxu0 0.0
  %1240 = vmatpush1.msra.mxu0 %v707
  %1241 = vmatprep.subr.mxu0 0.0
  %1242 = vmatpush1.msra.mxu0 %v712
  %1243 = vmatprep.subr.mxu0 0.0
  %1244 = vmatpush1.msra.mxu0 %v717
  %1245 = vmatprep.subr.mxu0 0.0
  %1246 = vmatpush1.msra.mxu0 %v722
  %1247 = vmatprep.subr.mxu0 0.0
  %1248 = vmatpush1.msra.mxu0 %v727
  %1249 = vmatprep.subr.mxu0 0.0
  %1250 = vmatpush1.msra.mxu0 %v732
  %1251 = vmatprep.subr.mxu0 0.0
  %1252 = vmatpush1.msra.mxu0 %v737
  %1253 = vmatprep.subr.mxu0 0.0
  %1254 = vmatpush1.msra.mxu0 %v742
  %1255 = vmatprep.subr.mxu0 0.0
  %1256 = vmatpush1.msra.mxu0 %v747
  %1257 = vmatprep.subr.mxu0 0.0
  %1258 = vmatpush1.msra.mxu0 %v752
  %1259 = vmatprep.subr.mxu0 0.0
  %1260 = vmatpush1.msra.mxu0 %v757
  %1261 = vmatprep.subr.mxu0 0.0
  %1262 = vmatpush1.msra.mxu0 %v762
  %1263 = vmatprep.subr.mxu0 0.0
  %1264 = vmatpush1.msra.mxu0 %v767
  %1265 = vmatprep.subr.mxu0 0.0
  %1266 = vmatpush1.msra.mxu0 %v772
  %1267 = vmatprep.subr.mxu0 0.0
  %1268 = vmatpush1.msra.mxu0 %v777
  %1269 = vmatprep.subr.mxu0 0.0
  %1270 = vmatpush1.msra.mxu0 %v782
  %1271 = vmatprep.subr.mxu0 0.0
  %1272 = vmatpush1.msra.mxu0 %v787
  %1273 = vmatprep.subr.mxu0 0.0
  %1274 = vmatpush1.msra.mxu0 %v792
  %1275 = vmatprep.subr.mxu0 0.0
  %1276 = vmatpush1.msra.mxu0 %v797
  %1277 = vmatprep.subr.mxu0 0.0
  %1278 = vmatpush1.msra.mxu0 %v802
  %1279 = vmatprep.subr.mxu0 0.0
  %1280 = vmatpush1.msra.mxu0 %v807
  %1281 = vmatprep.subr.mxu0 0.0
  %1282 = vmatpush1.msra.mxu0 %v812
  %1283 = vmatprep.subr.mxu0 0.0
  %1284 = vmatpush1.msra.mxu0 %v817
  %1285 = vmatprep.subr.mxu0 0.0
  %1286 = vmatpush1.msra.mxu0 %v822
  %1287 = vmatprep.subr.mxu0 0.0
  %1288 = vmatpush1.msra.mxu0 %v827
  %1289 = vmatprep.subr.mxu0 0.0
  %1290 = vmatpush1.msra.mxu0 %v832
  %1291 = vmatprep.mubr.f32.mxu0 %v671
  %1292 = vmatmul.mubr.f32.gmra.mrb[0].mxu0 %v670
  %v1293 = vpop.f32.mrb[0].mxu0
  %v1294 = vadd.f32 %v937, %v1293
  %v1295 = vpop.f32.mrb[0].mxu0
  %1296 = vdwg.mxu0
  %1297 = vmatprep.subr.mxu0 0.0
  %1298 = vmatpush1.msra.mxu0 %v837
  %1299 = vmatprep.subr.mxu0 0.0
  %1300 = vmatpush1.msra.mxu0 %v842
  %1301 = vmatprep.subr.mxu0 0.0
  %1302 = vmatpush1.msra.mxu0 %v847
  %1303 = vmatprep.subr.mxu0 0.0
  %1304 = vmatpush1.msra.mxu0 %v852
  %1305 = vmatprep.subr.mxu0 0.0
  %1306 = vmatpush1.msra.mxu0 %v857
  %1307 = vmatprep.subr.mxu0 0.0
  %1308 = vmatpush1.msra.mxu0 %v862
  %1309 = vmatprep.subr.mxu0 0.0
  %1310 = vmatpush1.msra.mxu0 %v867
  %1311 = vmatprep.subr.mxu0 0.0
  %1312 = vmatpush1.msra.mxu0 %v872
  %1313 = vmatprep.subr.mxu0 0.0
  %1314 = vmatpush1.msra.mxu0 %v877
  %1315 = vmatprep.subr.mxu0 0.0
  %1316 = vmatpush1.msra.mxu0 %v882
  %1317 = vmatprep.subr.mxu0 0.0
  %1318 = vmatpush1.msra.mxu0 %v887
  %1319 = vmatprep.subr.mxu0 0.0
  %1320 = vmatpush1.msra.mxu0 %v892
  %1321 = vmatprep.subr.mxu0 0.0
  %1322 = vmatpush1.msra.mxu0 %v897
  %1323 = vmatprep.subr.mxu0 0.0
  %1324 = vmatpush1.msra.mxu0 %v902
  %1325 = vmatprep.subr.mxu0 0.0
  %1326 = vmatpush1.msra.mxu0 %v907
  %1327 = vmatprep.subr.mxu0 0.0
  %1328 = vmatpush1.msra.mxu0 %v912
  %1329 = vmatprep.subr.mxu0 0.0
  %1330 = vmatpush1.msra.mxu0 0.0
  %1331 = vmatprep.subr.mxu0 0.0
  %1332 = vmatpush1.msra.mxu0 0.0
  %1333 = vmatprep.subr.mxu0 0.0
  %1334 = vmatpush1.msra.mxu0 0.0
  %1335 = vmatprep.subr.mxu0 0.0
  %1336 = vmatpush1.msra.mxu0 0.0
  %1337 = vmatprep.subr.mxu0 0.0
  %1338 = vmatpush1.msra.mxu0 0.0
  %1339 = vmatprep.subr.mxu0 0.0
  %1340 = vmatpush1.msra.mxu0 0.0
  %1341 = vmatprep.subr.mxu0 0.0
  %1342 = vmatpush1.msra.mxu0 0.0
  %1343 = vmatprep.subr.mxu0 0.0
  %1344 = vmatpush1.msra.mxu0 0.0
  %1345 = vmatprep.subr.mxu0 0.0
  %1346 = vmatpush1.msra.mxu0 0.0
  %1347 = vmatprep.subr.mxu0 0.0
  %1348 = vmatpush1.msra.mxu0 0.0
  %1349 = vmatprep.subr.mxu0 0.0
  %1350 = vmatpush1.msra.mxu0 0.0
  %1351 = vmatprep.subr.mxu0 0.0
  %1352 = vmatpush1.msra.mxu0 0.0
  %1353 = vmatprep.subr.mxu0 0.0
  %1354 = vmatpush1.msra.mxu0 0.0
  %1355 = vmatprep.subr.mxu0 0.0
  %1356 = vmatpush1.msra.mxu0 0.0
  %1357 = vmatprep.subr.mxu0 0.0
  %1358 = vmatpush1.msra.mxu0 0.0
  %1359 = vmatprep.subr.mxu0 0.0
  %1360 = vmatpush1.msra.mxu0 0.0
  %1361 = vmatprep.mubr.f32.mxu0 0.0
  %1362 = vmatmul.mubr.f32.gmra.mrb[0].mxu0 %v672
  %v1363 = vpop.f32.mrb[0].mxu0
  %v1364 = vadd.f32 %v1294, %v1363
  %v1365 = vpop.f32.mrb[0].mxu0
  %1366 = vdwg.mxu0
  %v1367 = vmax.f32 %v1081, 0.0
  %v1368 = vmax.f32 %v1083, 0.0
  %v1369 = vmax.f32 %v1223, 0.0
  %v1370 = vmax.f32 %v1225, 0.0
  %v1371 = vmax.f32 %v1364, 0.0
  %v1372 = vld [vmem:[%s8] sm:$0xff]
  %v1373 = vld [vmem:[%s8 + $0x8] sm:$0xff]
  %v1374 = vld [vmem:[%s8 + $0x10] sm:$0xff]
  %v1375 = vld [vmem:[%s8 + $0x18] sm:$0xff]
  %v1376 = vld [vmem:[%s8 + $0x20] sm:$0xff]
  %v1377 = vld [vmem:[%s8 + $0x28] sm:$0xff]
  %v1378 = vld [vmem:[%s8 + $0x30] sm:$0xff]
  %v1379 = vld [vmem:[%s8 + $0x38] sm:$0xff]
  %v1380 = vld [vmem:[%s8 + $0x40] sm:$0xff]
  %v1381 = vld [vmem:[%s8 + $0x48] sm:$0xff]
  %v1382 = vld [vmem:[%s8 + $0x50] sm:$0xff]
  %v1383 = vld [vmem:[%s8 + $0x58] sm:$0xff]
  %v1384 = vld [vmem:[%s8 + $0x60] sm:$0xff]
  %v1385 = vld [vmem:[%s8 + $0x68] sm:$0xff]
  %v1386 = vld [vmem:[%s8 + $0x70] sm:$0xff]
  %v1387 = vld [vmem:[%s8 + $0x78] sm:$0xff]
  %v1388 = vld [vmem:[%s8 + $0x80] sm:$0xff]
  %v1389 = vld [vmem:[%s8 + $0x88] sm:$0xff]
  %v1390 = vld [vmem:[%s8 + $0x90] sm:$0xff]
  %v1391 = vld [vmem:[%s8 + $0x98] sm:$0xff]
  %v1392 = vld [vmem:[%s8 + $0xa0] sm:$0xff]
  %v1393 = vld [vmem:[%s8 + $0xa8] sm:$0xff]
  %v1394 = vld [vmem:[%s8 + $0xb0] sm:$0xff]
  %v1395 = vld [vmem:[%s8 + $0xb8] sm:$0xff]
  %v1396 = vld [vmem:[%s8 + $0xc0] sm:$0xff]
  %v1397 = vld [vmem:[%s8 + $0xc8] sm:$0xff]
  %v1398 = vld [vmem:[%s8 + $0xd0] sm:$0xff]
  %v1399 = vld [vmem:[%s8 + $0xd8] sm:$0xff]
  %v1400 = vld [vmem:[%s8 + $0xe0] sm:$0xff]
  %v1401 = vld [vmem:[%s8 + $0xe8] sm:$0xff]
  %v1402 = vld [vmem:[%s8 + $0xf0] sm:$0xff]
  %v1403 = vld [vmem:[%s8 + $0xf8] sm:$0xff]
  %v1404 = vld [vmem:[%s8 + $0x100] sm:$0xff]
  %v1405 = vld [vmem:[%s8 + $0x108] sm:$0xff]
  %v1406 = vld [vmem:[%s8 + $0x110] sm:$0xff]
  %v1407 = vld [vmem:[%s8 + $0x118] sm:$0xff]
  %v1408 = vld [vmem:[%s8 + $0x120] sm:$0xff]
  %v1409 = vld [vmem:[%s8 + $0x128] sm:$0xff]
  %v1410 = vld [vmem:[%s8 + $0x130] sm:$0xff]
  %v1411 = vld [vmem:[%s8 + $0x138] sm:$0xff]
  %v1412 = vld [vmem:[%s8 + $0x140] sm:$0xff]
  %v1413 = vld [vmem:[%s8 + $0x148] sm:$0xff]
  %v1414 = vld [vmem:[%s8 + $0x150] sm:$0xff]
  %v1415 = vld [vmem:[%s8 + $0x158] sm:$0xff]
  %v1416 = vld [vmem:[%s8 + $0x160] sm:$0xff]
  %v1417 = vld [vmem:[%s8 + $0x168] sm:$0xff]
  %v1418 = vld [vmem:[%s8 + $0x170] sm:$0xff]
  %v1419 = vld [vmem:[%s8 + $0x178] sm:$0xff]
  %v1420 = vld [vmem:[%s8 + $0x180] sm:$0xff]
  %v1421 = vld [vmem:[%s8 + $0x188] sm:$0xff]
  %v1422 = vld [vmem:[%s8 + $0x190] sm:$0xff]
  %v1423 = vld [vmem:[%s8 + $0x198] sm:$0xff]
  %v1424 = vld [vmem:[%s8 + $0x1a0] sm:$0xff]
  %v1425 = vld [vmem:[%s8 + $0x1a8] sm:$0xff]
  %v1426 = vld [vmem:[%s8 + $0x1b0] sm:$0xff]
  %v1427 = vld [vmem:[%s8 + $0x1b8] sm:$0xff]
  %v1428 = vld [vmem:[%s8 + $0x1c0] sm:$0xff]
  %v1429 = vld [vmem:[%s8 + $0x1c8] sm:$0xff]
  %v1430 = vld [vmem:[%s8 + $0x1d0] sm:$0xff]
  %v1431 = vld [vmem:[%s8 + $0x1d8] sm:$0xff]
  %v1432 = vld [vmem:[%s8 + $0x1e0] sm:$0xff]
  %v1433 = vld [vmem:[%s8 + $0x1e8] sm:$0xff]
  %v1434 = vld [vmem:[%s8 + $0x1f0] sm:$0xff]
  %v1435 = vld [vmem:[%s8 + $0x1f8] sm:$0xff]
  %v1436 = vld [vmem:[%s8 + $0x200] sm:$0xff]
  %v1437 = vld [vmem:[%s8 + $0x208] sm:$0xff]
  %v1438 = vld [vmem:[%s8 + $0x210] sm:$0xff]
  %v1439 = vld [vmem:[%s8 + $0x218] sm:$0xff]
  %v1440 = vld [vmem:[%s8 + $0x220] sm:$0xff]
  %v1441 = vld [vmem:[%s8 + $0x228] sm:$0xff]
  %v1442 = vld [vmem:[%s8 + $0x230] sm:$0xff]
  %v1443 = vld [vmem:[%s8 + $0x238] sm:$0xff]
  %v1444 = vld [vmem:[%s8 + $0x240] sm:$0xff]
  %v1445 = vld [vmem:[%s8 + $0x248] sm:$0xff]
  %v1446 = vld [vmem:[%s8 + $0x250] sm:$0xff]
  %v1447 = vld [vmem:[%s8 + $0x258] sm:$0xff]
  %v1448 = vld [vmem:[%s8 + $0x260] sm:$0xff]
  %v1449 = vld [vmem:[%s8 + $0x268] sm:$0xff]
  %v1450 = vld [vmem:[%s8 + $0x270] sm:$0xff]
  %v1451 = vld [vmem:[%s8 + $0x278] sm:$0xff]
  %v1452 = vld [vmem:[%s1 + $0x6] ss:$0 sm:$0xff]
  %1453 = vmatprep.subr.mxu0 0.0
  %1454 = vmatpush1.msra.mxu0 %v1372
  %1455 = vmatprep.subr.mxu0 0.0
  %1456 = vmatpush1.msra.mxu0 %v1373
  %1457 = vmatprep.subr.mxu0 0.0
  %1458 = vmatpush1.msra.mxu0 %v1374
  %1459 = vmatprep.subr.mxu0 0.0
  %1460 = vmatpush1.msra.mxu0 %v1375
  %1461 = vmatprep.subr.mxu0 0.0
  %1462 = vmatpush1.msra.mxu0 %v1376
  %1463 = vmatprep.subr.mxu0 0.0
  %1464 = vmatpush1.msra.mxu0 %v1377
  %1465 = vmatprep.subr.mxu0 0.0
  %1466 = vmatpush1.msra.mxu0 %v1378
  %1467 = vmatprep.subr.mxu0 0.0
  %1468 = vmatpush1.msra.mxu0 %v1379
  %1469 = vmatprep.subr.mxu0 0.0
  %1470 = vmatpush1.msra.mxu0 %v1380
  %1471 = vmatprep.subr.mxu0 0.0
  %1472 = vmatpush1.msra.mxu0 %v1381
  %1473 = vmatprep.subr.mxu0 0.0
  %1474 = vmatpush1.msra.mxu0 %v1382
  %1475 = vmatprep.subr.mxu0 0.0
  %1476 = vmatpush1.msra.mxu0 %v1383
  %1477 = vmatprep.subr.mxu0 0.0
  %1478 = vmatpush1.msra.mxu0 %v1384
  %1479 = vmatprep.subr.mxu0 0.0
  %1480 = vmatpush1.msra.mxu0 %v1385
  %1481 = vmatprep.subr.mxu0 0.0
  %1482 = vmatpush1.msra.mxu0 %v1386
  %1483 = vmatprep.subr.mxu0 0.0
  %1484 = vmatpush1.msra.mxu0 %v1387
  %1485 = vmatprep.subr.mxu0 0.0
  %1486 = vmatpush1.msra.mxu0 %v1388
  %1487 = vmatprep.subr.mxu0 0.0
  %1488 = vmatpush1.msra.mxu0 %v1389
  %1489 = vmatprep.subr.mxu0 0.0
  %1490 = vmatpush1.msra.mxu0 %v1390
  %1491 = vmatprep.subr.mxu0 0.0
  %1492 = vmatpush1.msra.mxu0 %v1391
  %1493 = vmatprep.subr.mxu0 0.0
  %1494 = vmatpush1.msra.mxu0 %v1392
  %1495 = vmatprep.subr.mxu0 0.0
  %1496 = vmatpush1.msra.mxu0 %v1393
  %1497 = vmatprep.subr.mxu0 0.0
  %1498 = vmatpush1.msra.mxu0 %v1394
  %1499 = vmatprep.subr.mxu0 0.0
  %1500 = vmatpush1.msra.mxu0 %v1395
  %1501 = vmatprep.subr.mxu0 0.0
  %1502 = vmatpush1.msra.mxu0 %v1396
  %1503 = vmatprep.subr.mxu0 0.0
  %1504 = vmatpush1.msra.mxu0 %v1397
  %1505 = vmatprep.subr.mxu0 0.0
  %1506 = vmatpush1.msra.mxu0 %v1398
  %1507 = vmatprep.subr.mxu0 0.0
  %1508 = vmatpush1.msra.mxu0 %v1399
  %1509 = vmatprep.subr.mxu0 0.0
  %1510 = vmatpush1.msra.mxu0 %v1400
  %1511 = vmatprep.subr.mxu0 0.0
  %1512 = vmatpush1.msra.mxu0 %v1401
  %1513 = vmatprep.subr.mxu0 0.0
  %1514 = vmatpush1.msra.mxu0 %v1402
  %1515 = vmatprep.subr.mxu0 0.0
  %1516 = vmatpush1.msra.mxu0 %v1403
  %1517 = vmatprep.mubr.f32.mxu0 %v1368
  %1518 = vmatmul.mubr.f32.gmra.mrb[0].mxu0 %v1367
  %v1519 = vpop.f32.mrb[0].mxu0
  %v1520 = vadd.f32 %v1452, %v1519
  %v1521 = vpop.f32.mrb[0].mxu0
  %1522 = vdwg.mxu0
  %1523 = vmatprep.subr.mxu0 0.0
  %1524 = vmatpush1.msra.mxu0 %v1404
  %1525 = vmatprep.subr.mxu0 0.0
  %1526 = vmatpush1.msra.mxu0 %v1405
  %1527 = vmatprep.subr.mxu0 0.0
  %1528 = vmatpush1.msra.mxu0 %v1406
  %1529 = vmatprep.subr.mxu0 0.0
  %1530 = vmatpush1.msra.mxu0 %v1407
  %1531 = vmatprep.subr.mxu0 0.0
  %1532 = vmatpush1.msra.mxu0 %v1408
  %1533 = vmatprep.subr.mxu0 0.0
  %1534 = vmatpush1.msra.mxu0 %v1409
  %1535 = vmatprep.subr.mxu0 0.0
  %1536 = vmatpush1.msra.mxu0 %v1410
  %1537 = vmatprep.subr.mxu0 0.0
  %1538 = vmatpush1.msra.mxu0 %v1411
  %1539 = vmatprep.subr.mxu0 0.0
  %1540 = vmatpush1.msra.mxu0 %v1412
  %1541 = vmatprep.subr.mxu0 0.0
  %1542 = vmatpush1.msra.mxu0 %v1413
  %1543 = vmatprep.subr.mxu0 0.0
  %1544 = vmatpush1.msra.mxu0 %v1414
  %1545 = vmatprep.subr.mxu0 0.0
  %1546 = vmatpush1.msra.mxu0 %v1415
  %1547 = vmatprep.subr.mxu0 0.0
  %1548 = vmatpush1.msra.mxu0 %v1416
  %1549 = vmatprep.subr.mxu0 0.0
  %1550 = vmatpush1.msra.mxu0 %v1417
  %1551 = vmatprep.subr.mxu0 0.0
  %1552 = vmatpush1.msra.mxu0 %v1418
  %1553 = vmatprep.subr.mxu0 0.0
  %1554 = vmatpush1.msra.mxu0 %v1419
  %1555 = vmatprep.subr.mxu0 0.0
  %1556 = vmatpush1.msra.mxu0 %v1420
  %1557 = vmatprep.subr.mxu0 0.0
  %1558 = vmatpush1.msra.mxu0 %v1421
  %1559 = vmatprep.subr.mxu0 0.0
  %1560 = vmatpush1.msra.mxu0 %v1422
  %1561 = vmatprep.subr.mxu0 0.0
  %1562 = vmatpush1.msra.mxu0 %v1423
  %1563 = vmatprep.subr.mxu0 0.0
  %1564 = vmatpush1.msra.mxu0 %v1424
  %1565 = vmatprep.subr.mxu0 0.0
  %1566 = vmatpush1.msra.mxu0 %v1425
  %1567 = vmatprep.subr.mxu0 0.0
  %1568 = vmatpush1.msra.mxu0 %v1426
  %1569 = vmatprep.subr.mxu0 0.0
  %1570 = vmatpush1.msra.mxu0 %v1427
  %1571 = vmatprep.subr.mxu0 0.0
  %1572 = vmatpush1.msra.mxu0 %v1428
  %1573 = vmatprep.subr.mxu0 0.0
  %1574 = vmatpush1.msra.mxu0 %v1429
  %1575 = vmatprep.subr.mxu0 0.0
  %1576 = vmatpush1.msra.mxu0 %v1430
  %1577 = vmatprep.subr.mxu0 0.0
  %1578 = vmatpush1.msra.mxu0 %v1431
  %1579 = vmatprep.subr.mxu0 0.0
  %1580 = vmatpush1.msra.mxu0 %v1432
  %1581 = vmatprep.subr.mxu0 0.0
  %1582 = vmatpush1.msra.mxu0 %v1433
  %1583 = vmatprep.subr.mxu0 0.0
  %1584 = vmatpush1.msra.mxu0 %v1434
  %1585 = vmatprep.subr.mxu0 0.0
  %1586 = vmatpush1.msra.mxu0 %v1435
  %1587 = vmatprep.mubr.f32.mxu0 %v1370
  %1588 = vmatmul.mubr.f32.gmra.mrb[0].mxu0 %v1369
  %v1589 = vpop.f32.mrb[0].mxu0
  %v1590 = vadd.f32 %v1520, %v1589
  %v1591 = vpop.f32.mrb[0].mxu0
  %1592 = vdwg.mxu0
  %1593 = vmatprep.subr.mxu0 0.0
  %1594 = vmatpush1.msra.mxu0 %v1436
  %1595 = vmatprep.subr.mxu0 0.0
  %1596 = vmatpush1.msra.mxu0 %v1437
  %1597 = vmatprep.subr.mxu0 0.0
  %1598 = vmatpush1.msra.mxu0 %v1438
  %1599 = vmatprep.subr.mxu0 0.0
  %1600 = vmatpush1.msra.mxu0 %v1439
  %1601 = vmatprep.subr.mxu0 0.0
  %1602 = vmatpush1.msra.mxu0 %v1440
  %1603 = vmatprep.subr.mxu0 0.0
  %1604 = vmatpush1.msra.mxu0 %v1441
  %1605 = vmatprep.subr.mxu0 0.0
  %1606 = vmatpush1.msra.mxu0 %v1442
  %1607 = vmatprep.subr.mxu0 0.0
  %1608 = vmatpush1.msra.mxu0 %v1443
  %1609 = vmatprep.subr.mxu0 0.0
  %1610 = vmatpush1.msra.mxu0 %v1444
  %1611 = vmatprep.subr.mxu0 0.0
  %1612 = vmatpush1.msra.mxu0 %v1445
  %1613 = vmatprep.subr.mxu0 0.0
  %1614 = vmatpush1.msra.mxu0 %v1446
  %1615 = vmatprep.subr.mxu0 0.0
  %1616 = vmatpush1.msra.mxu0 %v1447
  %1617 = vmatprep.subr.mxu0 0.0
  %1618 = vmatpush1.msra.mxu0 %v1448
  %1619 = vmatprep.subr.mxu0 0.0
  %1620 = vmatpush1.msra.mxu0 %v1449
  %1621 = vmatprep.subr.mxu0 0.0
  %1622 = vmatpush1.msra.mxu0 %v1450
  %1623 = vmatprep.subr.mxu0 0.0
  %1624 = vmatpush1.msra.mxu0 %v1451
  %1625 = vmatprep.subr.mxu0 0.0
  %1626 = vmatpush1.msra.mxu0 0.0
  %1627 = vmatprep.subr.mxu0 0.0
  %1628 = vmatpush1.msra.mxu0 0.0
  %1629 = vmatprep.subr.mxu0 0.0
  %1630 = vmatpush1.msra.mxu0 0.0
  %1631 = vmatprep.subr.mxu0 0.0
  %1632 = vmatpush1.msra.mxu0 0.0
  %1633 = vmatprep.subr.mxu0 0.0
  %1634 = vmatpush1.msra.mxu0 0.0
  %1635 = vmatprep.subr.mxu0 0.0
  %1636 = vmatpush1.msra.mxu0 0.0
  %1637 = vmatprep.subr.mxu0 0.0
  %1638 = vmatpush1.msra.mxu0 0.0
  %1639 = vmatprep.subr.mxu0 0.0
  %1640 = vmatpush1.msra.mxu0 0.0
  %1641 = vmatprep.subr.mxu0 0.0
  %1642 = vmatpush1.msra.mxu0 0.0
  %1643 = vmatprep.subr.mxu0 0.0
  %1644 = vmatpush1.msra.mxu0 0.0
  %1645 = vmatprep.subr.mxu0 0.0
  %1646 = vmatpush1.msra.mxu0 0.0
  %1647 = vmatprep.subr.mxu0 0.0
  %1648 = vmatpush1.msra.mxu0 0.0
  %1649 = vmatprep.subr.mxu0 0.0
  %1650 = vmatpush1.msra.mxu0 0.0
  %1651 = vmatprep.subr.mxu0 0.0
  %1652 = vmatpush1.msra.mxu0 0.0
  %1653 = vmatprep.subr.mxu0 0.0
  %1654 = vmatpush1.msra.mxu0 0.0
  %1655 = vmatprep.subr.mxu0 0.0
  %1656 = vmatpush1.msra.mxu0 0.0
  %1657 = vmatprep.mubr.f32.mxu0 0.0
  %1658 = vmatmul.mubr.f32.gmra.mrb[0].mxu0 %v1371
  %v1659 = vpop.f32.mrb[0].mxu0
  %v1660 = vadd.f32 %v1590, %v1659
  %v1661 = vpop.f32.mrb[0].mxu0
  %1662 = vdwg.mxu0
  %1663 = vst [vmem:[%s9] sm:$0xff] %v1660
  // Predicated region
  $region38: #{net_forward.1} parent=0 // pred_check
    _
  $region39: #{net_forward.1} parent=0 // pred_check_branch
    %1665 = sbr.rel (0) target = $region41
  $region40: #{net_forward.1} parent=0 // pred_region
    _
  $region41: #{net_forward.1} parent=0 // pred_fallthru
    _
  // Predicated region
  $region42: #{net_forward.1} parent=0 // pred_check
    _
  $region43: #{net_forward.1} parent=0 // pred_check_branch
    %1667 = sbr.rel (0) target = $region45
  $region44: #{net_forward.1} parent=0 // pred_region
    _
  $region45: #{net_forward.1} parent=0 // pred_fallthru
    _

</llo_original>
